<compile_context>
chip_gen: v6e
topology: v6e:2x2x1
jax: 0.10.0
libtpu: 0.0.40
codegen_flags: <defaults>
</compile_context>

<pallas_src>
import jax
import jax.numpy as jnp
from jax import lax
from jax.experimental import pallas as pl
from jax.experimental.pallas import tpu as pltpu


# ----------------------------- hyper-params ---------------------------------
VOCAB = 100
BERT_HIDDEN = 32          # stand-in "bert_config.hidden_size" (small)
LSTM_HIDDEN = 64          # matches the module (self.lstm_hidden = 64)
D = 2 * LSTM_HIDDEN       # 128 = bidirectional LSTM output width
NUM_HEADS = 8
HEAD_DIM = D // NUM_HEADS # 16
WINDOW = 5
NUM_LABELS = 5
LANE_OUT = 128            # classifier output zero-padded to a full lane width
LN_EPS = 1e-5
NEG = -1000000000.0       # matches masked_fill(-1e9) in the PyTorch module


class ModelOutput:
    def __init__(self, logits, labels, loss=None):
        self.logits = logits
        self.labels = labels
        self.loss = loss


# --------------------------- fused Pallas kernel -----------------------------
def fused_sla_kernel(local_ref, kmask_ref, x_ref,
                     wqkv_ref, bqkv_ref, blk2_ref, wof_ref, bof_ref,
                     gamma_ref, beta_ref, wcls_ref, bcls_ref, out_ref):
    # One grid step == TILE_B batch elements (grid axis marked "parallel").
    TB, S_, _ = x_ref.shape
    xf = x_ref[...].reshape(TB * S_, D)            # (N, D) f32 lstm_out (dropout=eval identity)
    xb = xf.astype(jnp.bfloat16)

    # --- fused Q/K/V projection on the whole batch tile ----------------------
    # (Q columns pre-scaled by 1/sqrt(head_dim) host-side.)
    qkv = jnp.dot(xb, wqkv_ref[...], preferred_element_type=jnp.float32) + bqkv_ref[...]

    blk2 = blk2_ref[...]                           # (HS, 2D) bf16 head structure (constant)
    blk_k = blk2[:, :D]                            # (HS, D)  bf16
    local = local_ref[...]                         # (S, HS) f32 local-window mask (constant)

    # --- head-batched local attention, one batch element at a time ----------
    # Heads live on the score-matrix column axis:
    #   scores[s, h*S + t] = <q_h[s], k_h[t]>  (block-diagonal key matrix)
    rows = []
    for i in range(TB):
        q = qkv[i * S_:(i + 1) * S_, :D].astype(jnp.bfloat16)
        k = qkv[i * S_:(i + 1) * S_, D:2 * D].astype(jnp.bfloat16)
        v = qkv[i * S_:(i + 1) * S_, 2 * D:].astype(jnp.bfloat16)

        Kb = jnp.tile(k, (NUM_HEADS, 1)) * blk_k                   # (HS, D) bf16
        vext = jnp.concatenate([v, jnp.ones_like(v)], axis=1)      # (S, 2D) bf16  [v | 1]
        VDb = jnp.tile(vext, (NUM_HEADS, 1)) * blk2                # (HS, 2D) bf16 [Vb | blk]

        # q @ Kb^T without an explicit transpose (contract minor dims).
        scores = lax.dot_general(q, Kb, (((1,), (1,)), ((), ())),
                                 preferred_element_type=jnp.float32)   # (S, HS)

        valid = (local * kmask_ref[i]) > 0.5                       # key-mask & |i-j|<=window
        scores = jnp.where(valid, scores, NEG)                     # masked_fill(-1e9)

        # exact per-head max (matches torch per-head softmax stability)
        mparts = []
        for h in range(NUM_HEADS):
            mh = jnp.max(scores[:, h * S_:(h + 1) * S_], axis=-1, keepdims=True)
            mparts.append(jnp.broadcast_to(mh, (S_, S_)))
        m = jnp.concatenate(mparts, axis=-1)                       # (S, HS)

        e = jnp.exp(scores - m).astype(jnp.bfloat16)               # (S, HS)
        # fused value + denominator matmul: one 256-wide MXU pass
        uv = jnp.dot(e, VDb, preferred_element_type=jnp.float32)   # (S, 2D)
        unnorm, denom = uv[:, :D], uv[:, D:]                       # denom >= 1 (per-head max)
        rows.append(unnorm * pl.reciprocal(denom, approx=True))    # (S, D) in (seq, hidden) layout

    attn = rows[0] if TB == 1 else jnp.concatenate(rows, axis=0)   # (N, D)

    # --- folded (fc_sla o sla.fc_out), residual, LayerNorm --------------------
    sla = jnp.dot(attn.astype(jnp.bfloat16), wof_ref[...],
                  preferred_element_type=jnp.float32) + bof_ref[...]
    fused = xf + sla
    mu = jnp.mean(fused, axis=-1, keepdims=True)
    var = jnp.maximum(jnp.mean(fused * fused, axis=-1, keepdims=True) - mu * mu, 0.0)
    normed = (fused - mu) * lax.rsqrt(var + LN_EPS) * gamma_ref[...] + beta_ref[...]

    # --- classifier (zero-padded to 128 output lanes -> dense stores) --------
    logits = jnp.dot(normed.astype(jnp.bfloat16), wcls_ref[...],
                     preferred_element_type=jnp.float32) + bcls_ref[...]
    out_ref[...] = logits.reshape(TB, S_, LANE_OUT)


def _choose_tile_b(B):
    """Largest batch tile <= 16 dividing B that still leaves >= 2 grid steps (v7x has 2 TCs)."""
    for tb in (16, 8, 4, 2, 1):
        if B % tb == 0 and (B // tb) >= 2:
            return tb
    return 1


def sla_head(lstm_out, attention_mask, p):
    """Fused SLA / fc / layernorm / classifier Pallas kernel. Returns (B, S, NUM_LABELS)."""
    B, S, _ = lstm_out.shape
    HS = NUM_HEADS * S
    TILE_B = _choose_tile_b(B)
    grid = (B // TILE_B,)

    # --- tiny constant masks (replace the old (B, S, 8S) f32 validity tensor) ---
    s_idx = jnp.arange(S, dtype=jnp.int32)
    t_idx = jnp.arange(HS, dtype=jnp.int32) % S
    local_ok = (jnp.abs(s_idx[:, None] - t_idx[None, :]) <= WINDOW).astype(jnp.float32)  # (S, HS)
    kmask = jnp.tile((attention_mask != 0).astype(jnp.float32)[:, None, :],
                     (1, 1, NUM_HEADS))                                                  # (B, 1, HS)

    # Block-diagonal head structure, precomputed once (bf16, fetched once).
    row_head = jnp.arange(HS, dtype=jnp.int32) // S
    col_head = jnp.arange(D, dtype=jnp.int32) // HEAD_DIM
    blk = (row_head[:, None] == col_head[None, :]).astype(jnp.bfloat16)    # (HS, D)
    blk2 = jnp.concatenate([blk, blk], axis=1)                             # (HS, 2D)

    # Host-side algebraic weight fusion (exact in f32) + bf16 cast for the MXU.
    scale = 1.0 / (HEAD_DIM ** 0.5)
    wqkv = jnp.concatenate([p["wq"] * scale, p["wk"], p["wv"]], axis=1).astype(jnp.bfloat16)
    bqkv = jnp.concatenate([p["bq"] * scale, p["bk"], p["bv"]], axis=1)    # (1, 3D) f32
    wof = (p["wo"] @ p["wfc"]).astype(jnp.bfloat16)                        # fc_out folded into fc_sla
    bof = p["bo"] @ p["wfc"] + p["bfc"]                                    # (1, D) f32
    wcls = jnp.zeros((D, LANE_OUT), jnp.float32).at[:, :NUM_LABELS].set(p["wcls"]).astype(jnp.bfloat16)
    bcls = jnp.zeros((1, LANE_OUT), jnp.float32).at[:, :NUM_LABELS].set(p["bcls"])

    in_specs = [
        pl.BlockSpec((S, HS), lambda b: (0, 0)),               # local-window mask (constant)
        pl.BlockSpec((TILE_B, 1, HS), lambda b: (b, 0, 0)),    # key mask (tiled over heads)
        pl.BlockSpec((TILE_B, S, D), lambda b: (b, 0, 0)),     # lstm_out
        pl.BlockSpec((D, 3 * D), lambda b: (0, 0)),            # Wqkv (Q pre-scaled)
        pl.BlockSpec((1, 3 * D), lambda b: (0, 0)),            # bqkv
        pl.BlockSpec((HS, 2 * D), lambda b: (0, 0)),           # [blk | blk] head structure
        pl.BlockSpec((D, D), lambda b: (0, 0)),                # W(fc_sla . fc_out)
        pl.BlockSpec((1, D), lambda b: (0, 0)),                # b(fc_sla . fc_out)
        pl.BlockSpec((1, D), lambda b: (0, 0)),                # ln gamma
        pl.BlockSpec((1, D), lambda b: (0, 0)),                # ln beta
        pl.BlockSpec((D, LANE_OUT), lambda b: (0, 0)),         # classifier W (padded)
        pl.BlockSpec((1, LANE_OUT), lambda b: (0, 0)),         # classifier b (padded)
    ]
    out_spec = pl.BlockSpec((TILE_B, S, LANE_OUT), lambda b: (b, 0, 0))

    logits_pad = pl.pallas_call(
        fused_sla_kernel,
        out_shape=jax.ShapeDtypeStruct((B, S, LANE_OUT), jnp.float32),
        grid_spec=pltpu.PrefetchScalarGridSpec(
            num_scalar_prefetch=0,
            grid=grid,
            in_specs=in_specs,
            out_specs=out_spec,
        ),
        compiler_params=pltpu.CompilerParams(dimension_semantics=("parallel",)),
    )(local_ok, kmask, lstm_out, wqkv, bqkv, blk2, wof, bof,
      p["gamma"], p["beta"], wcls, bcls)

    return logits_pad[:, :, :NUM_LABELS]


# ------------------------------ JAX glue -------------------------------------
def bilstm(x, p):
    """Single-layer bidirectional LSTM, PyTorch gate order (i, f, g, o).
    Both directions run in ONE lax.scan (stacked on a leading direction axis),
    with the input projection hoisted out of the recurrence."""
    B, S, _ = x.shape
    H = LSTM_HIDDEN
    w_ih = jnp.stack([p["w_ih_f"], p["w_ih_b"]])                       # (2, 4H, In)
    w_hh = jnp.stack([p["w_hh_f"], p["w_hh_b"]])                       # (2, 4H, H)
    bias = jnp.stack([p["b_ih_f"] + p["b_hh_f"],
                      p["b_ih_b"] + p["b_hh_b"]])                      # (2, 4H)

    x2 = jnp.stack([x, x[:, ::-1, :]], axis=0)                         # (2, B, S, In)
    xp = jnp.einsum('dbsi,dgi->sdbg', x2, w_ih) + bias[None, :, None, :]   # (S, 2, B, 4H)

    def step(carry, xt):
        h, c = carry                                                   # (2, B, H)
        gates = xt + jnp.einsum('dbh,dgh->dbg', h, w_hh)               # (2, B, 4H)
        i, f, g, o = jnp.split(gates, 4, axis=-1)
        i, f, o = jax.nn.sigmoid(i), jax.nn.sigmoid(f), jax.nn.sigmoid(o)
        g = jnp.tanh(g)
        c = f * c + i * g
        h = o * jnp.tanh(c)
        return (h, c), h

    z = jnp.zeros((2, B, H), jnp.float32)
    _, hs = lax.scan(step, (z, z), xp)                                 # (S, 2, B, H)
    fwd = jnp.transpose(hs[:, 0], (1, 0, 2))                           # (B, S, H)
    bwd = jnp.transpose(hs[:, 1], (1, 0, 2))[:, ::-1, :]               # un-reverse
    return jnp.concatenate([fwd, bwd], axis=-1)                        # (B, S, 2H)


def crf_decode(emissions, mask, start_t, end_t, trans):
    """Viterbi decode (torchcrf semantics, prefix masks). Returns (B, S) int32.
    # TODO(synk): torchcrf returns ragged python lists; here padded positions repeat the last tag."""
    B, S, L = emissions.shape
    score = start_t[None, :] + emissions[:, 0]          # (B, L)
    history = []
    for t in range(1, S):
        nxt = score[:, :, None] + trans[None] + emissions[:, t][:, None, :]
        best, idx = nxt.max(axis=1), nxt.argmax(axis=1)
        m = mask[:, t][:, None]
        score = jnp.where(m, best, score)
        history.append(idx)
    score = score + end_t[None, :]
    tag = jnp.argmax(score, axis=1)                     # (B,)
    tags = [tag]
    for t in range(S - 2, -1, -1):
        prev = jnp.take_along_axis(history[t], tag[:, None], axis=1)[:, 0]
        tag = jnp.where(mask[:, t + 1], prev, tag)
        tags.append(tag)
    return jnp.stack(tags[::-1], axis=1).astype(jnp.int32)


@jax.jit
def _forward_core(params, input_ids, attention_mask):
    # TODO(synk): BertModel.from_pretrained replaced by a deterministic embedding stand-in.
    seq_out = params["emb"][input_ids]                   # (B, S, BERT_HIDDEN)
    lstm_out = bilstm(seq_out, params)                   # (B, S, 128)
    # nn.Dropout(0.5) -> identity (eval mode)
    emissions = sla_head(lstm_out, attention_mask, params)   # Pallas kernel, (B, S, NUM_LABELS)
    pred = crf_decode(emissions, attention_mask.astype(bool),
                      params["crf_start"], params["crf_end"], params["crf_trans"])
    return pred


def forward(params, input_ids, attention_mask, labels=None):
    pred = _forward_core(params, input_ids, attention_mask)
    # TODO(synk): CRF negative log-likelihood (training loss) not implemented; labels path unused here.
    return ModelOutput(pred, labels, None)


# --------------------------- deterministic init -------------------------------
def init_params(key):
    ks = jax.random.split(key, 24)
    n = lambda k, s, sc=0.05: (jax.random.normal(k, s) * sc).astype(jnp.float32)
    p = {}
    p["emb"] = n(ks[0], (VOCAB, BERT_HIDDEN), 0.1)
    # BiLSTM (PyTorch layout: (4H, in) / (4H, H), gate order i,f,g,o)
    p["w_ih_f"] = n(ks[1], (4 * LSTM_HIDDEN, BERT_HIDDEN))
    p["w_hh_f"] = n(ks[2], (4 * LSTM_HIDDEN, LSTM_HIDDEN))
    p["b_ih_f"] = n(ks[3], (4 * LSTM_HIDDEN,))
    p["b_hh_f"] = n(ks[4], (4 * LSTM_HIDDEN,))
    p["w_ih_b"] = n(ks[5], (4 * LSTM_HIDDEN, BERT_HIDDEN))
    p["w_hh_b"] = n(ks[6], (4 * LSTM_HIDDEN, LSTM_HIDDEN))
    p["b_ih_b"] = n(ks[7], (4 * LSTM_HIDDEN,))
    p["b_hh_b"] = n(ks[8], (4 * LSTM_HIDDEN,))
    # SLA (weights stored (in, out)) + fc_sla + layernorm + classifier
    p["wq"] = n(ks[9], (D, D));  p["bq"] = n(ks[10], (1, D))
    p["wk"] = n(ks[11], (D, D)); p["bk"] = n(ks[12], (1, D))
    p["wv"] = n(ks[13], (D, D)); p["bv"] = n(ks[14], (1, D))
    p["wo"] = n(ks[15], (D, D)); p["bo"] = n(ks[16], (1, D))
    p["wfc"] = n(ks[17], (D, D)); p["bfc"] = n(ks[18], (1, D))
    p["gamma"] = jnp.ones((1, D), jnp.float32)
    p["beta"] = jnp.zeros((1, D), jnp.float32)
    p["wcls"] = n(ks[19], (D, NUM_LABELS)); p["bcls"] = n(ks[20], (1, NUM_LABELS))
    # CRF
    p["crf_start"] = n(ks[21], (NUM_LABELS,), 0.1)
    p["crf_end"] = n(ks[22], (NUM_LABELS,), 0.1)
    p["crf_trans"] = n(ks[23], (NUM_LABELS, NUM_LABELS), 0.1)
    return p


# --------------------------------- main ---------------------------------------
if __name__ == "__main__":
    B, S = 2, 16
    key = jax.random.PRNGKey(0)
    k_ids, k_par = jax.random.split(key)
    input_ids = jax.random.randint(k_ids, (B, S), 0, VOCAB, dtype=jnp.int32)
    attention_mask = jnp.ones((B, S), jnp.int32).at[1, 12:].set(0)  # prefix mask

    params = init_params(jax.random.PRNGKey(42))
    out = forward(params, input_ids, attention_mask)

    jax.block_until_ready(out.logits)   # out.logits holds CRF-decoded tags (B, S)
    assert out.logits.shape == (B, S)
    print("KERNEL_OK")
</pallas_src>

<mosaic_0001>
module attributes {stable_mosaic.version = 11 : i64} {
  func.func @fused_sla_kernel(%arg0: i32, %arg1: memref<16x128xf32, #tpu.memory_space<vmem>>, %arg2: memref<1x1x128xf32, #tpu.memory_space<vmem>>, %arg3: memref<1x16x128xf32, #tpu.memory_space<vmem>>, %arg4: memref<128x384xbf16, #tpu.memory_space<vmem>>, %arg5: memref<1x384xf32, #tpu.memory_space<vmem>>, %arg6: memref<128x256xbf16, #tpu.memory_space<vmem>>, %arg7: memref<128x128xbf16, #tpu.memory_space<vmem>>, %arg8: memref<1x128xf32, #tpu.memory_space<vmem>>, %arg9: memref<1x128xf32, #tpu.memory_space<vmem>>, %arg10: memref<1x128xf32, #tpu.memory_space<vmem>>, %arg11: memref<128x128xbf16, #tpu.memory_space<vmem>>, %arg12: memref<1x128xf32, #tpu.memory_space<vmem>>, %arg13: memref<1x16x128xf32, #tpu.memory_space<vmem>>) attributes {dimension_semantics = [#tpu.dimension_semantics<parallel>], iteration_bounds = array<i64: 2>, scalar_prefetch = 0 : i64, scratch_operands = 0 : i64, tpu.core_type = #tpu.core_type<tc>, window_params = [{pipeline_mode = #tpu.pipeline_mode<synchronous>, transform_indices = @transform_0, window_bounds = array<i64: 16, 128>}, {transform_indices = @transform_1, window_bounds = array<i64: 1, 1, 128>}, {transform_indices = @transform_2, window_bounds = array<i64: 1, 16, 128>}, {pipeline_mode = #tpu.pipeline_mode<synchronous>, transform_indices = @transform_3, window_bounds = array<i64: 128, 384>}, {pipeline_mode = #tpu.pipeline_mode<synchronous>, transform_indices = @transform_4, window_bounds = array<i64: 1, 384>}, {pipeline_mode = #tpu.pipeline_mode<synchronous>, transform_indices = @transform_5, window_bounds = array<i64: 128, 256>}, {pipeline_mode = #tpu.pipeline_mode<synchronous>, transform_indices = @transform_6, window_bounds = array<i64: 128, 128>}, {pipeline_mode = #tpu.pipeline_mode<synchronous>, transform_indices = @transform_7, window_bounds = array<i64: 1, 128>}, {pipeline_mode = #tpu.pipeline_mode<synchronous>, transform_indices = @transform_8, window_bounds = array<i64: 1, 128>}, {pipeline_mode = #tpu.pipeline_mode<synchronous>, transform_indices = @transform_9, window_bounds = array<i64: 1, 128>}, {pipeline_mode = #tpu.pipeline_mode<synchronous>, transform_indices = @transform_10, window_bounds = array<i64: 128, 128>}, {pipeline_mode = #tpu.pipeline_mode<synchronous>, transform_indices = @transform_11, window_bounds = array<i64: 1, 128>}, {transform_indices = @transform_12, window_bounds = array<i64: 1, 16, 128>}]} {
    %c0 = arith.constant 0 : index
    %c0_0 = arith.constant 0 : index
    %c0_1 = arith.constant 0 : index
    %0 = vector.load %arg3[%c0, %c0_0, %c0_1] : memref<1x16x128xf32, #tpu.memory_space<vmem>>, vector<1x16x128xf32>
    %1 = vector.shape_cast %0 : vector<1x16x128xf32> to vector<16x128xf32>
    %2 = arith.truncf %1 : vector<16x128xf32> to vector<16x128xbf16>
    %c0_2 = arith.constant 0 : index
    %c0_3 = arith.constant 0 : index
    %3 = vector.load %arg4[%c0_2, %c0_3] : memref<128x384xbf16, #tpu.memory_space<vmem>>, vector<128x384xbf16>
    %cst = arith.constant dense<0.000000e+00> : vector<16x384xf32>
    %4 = tpu.matmul %2, %3, %cst {dimension_numbers = #tpu.dot_dimension_numbers<[1], [0], [0], [1], [0, 0, 1, 1], [], []>} : vector<16x128xbf16>, vector<128x384xbf16>, vector<16x384xf32> -> vector<16x384xf32>
    %c0_4 = arith.constant 0 : index
    %c0_5 = arith.constant 0 : index
    %5 = vector.load %arg5[%c0_4, %c0_5] : memref<1x384xf32, #tpu.memory_space<vmem>>, vector<1x384xf32>
    %6 = vector.broadcast %5 : vector<1x384xf32> to vector<16x384xf32>
    %7 = arith.addf %4, %6 : vector<16x384xf32>
    %c0_6 = arith.constant 0 : index
    %c0_7 = arith.constant 0 : index
    %8 = vector.load %arg6[%c0_6, %c0_7] : memref<128x256xbf16, #tpu.memory_space<vmem>>, vector<128x256xbf16>
    %9 = vector.extract_strided_slice %8 {offsets = [0, 0], sizes = [128, 128], strides = [1, 1]} : vector<128x256xbf16> to vector<128x128xbf16>
    %c0_8 = arith.constant 0 : index
    %c0_9 = arith.constant 0 : index
    %10 = vector.load %arg1[%c0_8, %c0_9] : memref<16x128xf32, #tpu.memory_space<vmem>>, vector<16x128xf32>
    %11 = vector.extract_strided_slice %7 {offsets = [0, 0], sizes = [16, 128], strides = [1, 1]} : vector<16x384xf32> to vector<16x128xf32>
    %12 = arith.truncf %11 : vector<16x128xf32> to vector<16x128xbf16>
    %13 = vector.extract_strided_slice %7 {offsets = [0, 128], sizes = [16, 128], strides = [1, 1]} : vector<16x384xf32> to vector<16x128xf32>
    %14 = arith.truncf %13 : vector<16x128xf32> to vector<16x128xbf16>
    %15 = vector.extract_strided_slice %7 {offsets = [0, 256], sizes = [16, 128], strides = [1, 1]} : vector<16x384xf32> to vector<16x128xf32>
    %16 = arith.truncf %15 : vector<16x128xf32> to vector<16x128xbf16>
    %17 = tpu.concatenate %14, %14, %14, %14, %14, %14, %14, %14 in 0 : vector<16x128xbf16>, vector<16x128xbf16>, vector<16x128xbf16>, vector<16x128xbf16>, vector<16x128xbf16>, vector<16x128xbf16>, vector<16x128xbf16>, vector<16x128xbf16> -> vector<128x128xbf16>
    %18 = arith.mulf %17, %9 : vector<128x128xbf16>
    %cst_10 = arith.constant 1.000000e+00 : bf16
    %19 = vector.broadcast %cst_10 : bf16 to vector<16x128xbf16>
    %20 = tpu.concatenate %16, %19 in 1 : vector<16x128xbf16>, vector<16x128xbf16> -> vector<16x256xbf16>
    %21 = tpu.concatenate %20, %20, %20, %20, %20, %20, %20, %20 in 0 : vector<16x256xbf16>, vector<16x256xbf16>, vector<16x256xbf16>, vector<16x256xbf16>, vector<16x256xbf16>, vector<16x256xbf16>, vector<16x256xbf16>, vector<16x256xbf16> -> vector<128x256xbf16>
    %22 = arith.mulf %21, %8 : vector<128x256xbf16>
    %cst_11 = arith.constant dense<0.000000e+00> : vector<16x128xf32>
    %23 = tpu.matmul %12, %18, %cst_11 {dimension_numbers = #tpu.dot_dimension_numbers<[1], [1], [0], [0], [0, 0, 1, 0], [], []>} : vector<16x128xbf16>, vector<128x128xbf16>, vector<16x128xf32> -> vector<16x128xf32>
    %c0_12 = arith.constant 0 : index
    %c0_13 = arith.constant 0 : index
    %c0_14 = arith.constant 0 : index
    %24 = vector.load %arg2[%c0_12, %c0_13, %c0_14] : memref<1x1x128xf32, #tpu.memory_space<vmem>>, vector<1x1x128xf32>
    %25 = vector.shape_cast %24 : vector<1x1x128xf32> to vector<1x128xf32>
    %26 = vector.broadcast %25 : vector<1x128xf32> to vector<16x128xf32>
    %27 = arith.mulf %10, %26 : vector<16x128xf32>
    %cst_15 = arith.constant 5.000000e-01 : f32
    %28 = vector.broadcast %cst_15 : f32 to vector<16x128xf32>
    %29 = arith.cmpf ogt, %27, %28 : vector<16x128xf32>
    %cst_16 = arith.constant -1.000000e+09 : f32
    %30 = vector.broadcast %cst_16 : f32 to vector<16x128xf32>
    %31 = arith.select %29, %23, %30 : vector<16x128xi1>, vector<16x128xf32>
    %32 = vector.extract_strided_slice %31 {offsets = [0, 0], sizes = [16, 16], strides = [1, 1]} : vector<16x128xf32> to vector<16x16xf32>
    %cst_17 = arith.constant dense<0xFF800000> : vector<16xf32>
    %33 = vector.multi_reduction <maximumf>, %32, %cst_17 [1] : vector<16x16xf32> to vector<16xf32>
    %34 = vector.shape_cast %33 : vector<16xf32> to vector<16x1xf32>
    %35 = vector.shape_cast %34 : vector<16x1xf32> to vector<16x1xf32>
    %36 = vector.broadcast %35 : vector<16x1xf32> to vector<16x16xf32>
    %37 = vector.extract_strided_slice %31 {offsets = [0, 16], sizes = [16, 16], strides = [1, 1]} : vector<16x128xf32> to vector<16x16xf32>
    %cst_18 = arith.constant dense<0xFF800000> : vector<16xf32>
    %38 = vector.multi_reduction <maximumf>, %37, %cst_18 [1] : vector<16x16xf32> to vector<16xf32>
    %39 = vector.shape_cast %38 : vector<16xf32> to vector<16x1xf32>
    %40 = vector.shape_cast %39 : vector<16x1xf32> to vector<16x1xf32>
    %41 = vector.broadcast %40 : vector<16x1xf32> to vector<16x16xf32>
    %42 = vector.extract_strided_slice %31 {offsets = [0, 32], sizes = [16, 16], strides = [1, 1]} : vector<16x128xf32> to vector<16x16xf32>
    %cst_19 = arith.constant dense<0xFF800000> : vector<16xf32>
    %43 = vector.multi_reduction <maximumf>, %42, %cst_19 [1] : vector<16x16xf32> to vector<16xf32>
    %44 = vector.shape_cast %43 : vector<16xf32> to vector<16x1xf32>
    %45 = vector.shape_cast %44 : vector<16x1xf32> to vector<16x1xf32>
    %46 = vector.broadcast %45 : vector<16x1xf32> to vector<16x16xf32>
    %47 = vector.extract_strided_slice %31 {offsets = [0, 48], sizes = [16, 16], strides = [1, 1]} : vector<16x128xf32> to vector<16x16xf32>
    %cst_20 = arith.constant dense<0xFF800000> : vector<16xf32>
    %48 = vector.multi_reduction <maximumf>, %47, %cst_20 [1] : vector<16x16xf32> to vector<16xf32>
    %49 = vector.shape_cast %48 : vector<16xf32> to vector<16x1xf32>
    %50 = vector.shape_cast %49 : vector<16x1xf32> to vector<16x1xf32>
    %51 = vector.broadcast %50 : vector<16x1xf32> to vector<16x16xf32>
    %52 = vector.extract_strided_slice %31 {offsets = [0, 64], sizes = [16, 16], strides = [1, 1]} : vector<16x128xf32> to vector<16x16xf32>
    %cst_21 = arith.constant dense<0xFF800000> : vector<16xf32>
    %53 = vector.multi_reduction <maximumf>, %52, %cst_21 [1] : vector<16x16xf32> to vector<16xf32>
    %54 = vector.shape_cast %53 : vector<16xf32> to vector<16x1xf32>
    %55 = vector.shape_cast %54 : vector<16x1xf32> to vector<16x1xf32>
    %56 = vector.broadcast %55 : vector<16x1xf32> to vector<16x16xf32>
    %57 = vector.extract_strided_slice %31 {offsets = [0, 80], sizes = [16, 16], strides = [1, 1]} : vector<16x128xf32> to vector<16x16xf32>
    %cst_22 = arith.constant dense<0xFF800000> : vector<16xf32>
    %58 = vector.multi_reduction <maximumf>, %57, %cst_22 [1] : vector<16x16xf32> to vector<16xf32>
    %59 = vector.shape_cast %58 : vector<16xf32> to vector<16x1xf32>
    %60 = vector.shape_cast %59 : vector<16x1xf32> to vector<16x1xf32>
    %61 = vector.broadcast %60 : vector<16x1xf32> to vector<16x16xf32>
    %62 = vector.extract_strided_slice %31 {offsets = [0, 96], sizes = [16, 16], strides = [1, 1]} : vector<16x128xf32> to vector<16x16xf32>
    %cst_23 = arith.constant dense<0xFF800000> : vector<16xf32>
    %63 = vector.multi_reduction <maximumf>, %62, %cst_23 [1] : vector<16x16xf32> to vector<16xf32>
    %64 = vector.shape_cast %63 : vector<16xf32> to vector<16x1xf32>
    %65 = vector.shape_cast %64 : vector<16x1xf32> to vector<16x1xf32>
    %66 = vector.broadcast %65 : vector<16x1xf32> to vector<16x16xf32>
    %67 = vector.extract_strided_slice %31 {offsets = [0, 112], sizes = [16, 16], strides = [1, 1]} : vector<16x128xf32> to vector<16x16xf32>
    %cst_24 = arith.constant dense<0xFF800000> : vector<16xf32>
    %68 = vector.multi_reduction <maximumf>, %67, %cst_24 [1] : vector<16x16xf32> to vector<16xf32>
    %69 = vector.shape_cast %68 : vector<16xf32> to vector<16x1xf32>
    %70 = vector.shape_cast %69 : vector<16x1xf32> to vector<16x1xf32>
    %71 = vector.broadcast %70 : vector<16x1xf32> to vector<16x16xf32>
    %72 = tpu.concatenate %36, %41, %46, %51, %56, %61, %66, %71 in 1 : vector<16x16xf32>, vector<16x16xf32>, vector<16x16xf32>, vector<16x16xf32>, vector<16x16xf32>, vector<16x16xf32>, vector<16x16xf32>, vector<16x16xf32> -> vector<16x128xf32>
    %73 = arith.subf %31, %72 : vector<16x128xf32>
    %74 = math.exp %73 : vector<16x128xf32>
    %75 = arith.truncf %74 : vector<16x128xf32> to vector<16x128xbf16>
    %cst_25 = arith.constant dense<0.000000e+00> : vector<16x256xf32>
    %76 = tpu.matmul %75, %22, %cst_25 {dimension_numbers = #tpu.dot_dimension_numbers<[1], [0], [0], [1], [0, 0, 1, 1], [], []>} : vector<16x128xbf16>, vector<128x256xbf16>, vector<16x256xf32> -> vector<16x256xf32>
    %77 = vector.extract_strided_slice %76 {offsets = [0, 0], sizes = [16, 128], strides = [1, 1]} : vector<16x256xf32> to vector<16x128xf32>
    %78 = vector.extract_strided_slice %76 {offsets = [0, 128], sizes = [16, 128], strides = [1, 1]} : vector<16x256xf32> to vector<16x128xf32>
    %79 = tpu.reciprocal %78 {approx = true} : vector<16x128xf32> -> vector<16x128xf32>
    %80 = arith.mulf %77, %79 : vector<16x128xf32>
    %81 = arith.truncf %80 : vector<16x128xf32> to vector<16x128xbf16>
    %c0_26 = arith.constant 0 : index
    %c0_27 = arith.constant 0 : index
    %82 = vector.load %arg7[%c0_26, %c0_27] : memref<128x128xbf16, #tpu.memory_space<vmem>>, vector<128x128xbf16>
    %cst_28 = arith.constant dense<0.000000e+00> : vector<16x128xf32>
    %83 = tpu.matmul %81, %82, %cst_28 {dimension_numbers = #tpu.dot_dimension_numbers<[1], [0], [0], [1], [0, 0, 1, 1], [], []>} : vector<16x128xbf16>, vector<128x128xbf16>, vector<16x128xf32> -> vector<16x128xf32>
    %c0_29 = arith.constant 0 : index
    %c0_30 = arith.constant 0 : index
    %84 = vector.load %arg8[%c0_29, %c0_30] : memref<1x128xf32, #tpu.memory_space<vmem>>, vector<1x128xf32>
    %85 = vector.broadcast %84 : vector<1x128xf32> to vector<16x128xf32>
    %86 = arith.addf %83, %85 : vector<16x128xf32>
    %87 = arith.addf %1, %86 : vector<16x128xf32>
    %cst_31 = arith.constant dense<0.000000e+00> : vector<16xf32>
    %88 = vector.multi_reduction <add>, %87, %cst_31 [1] : vector<16x128xf32> to vector<16xf32>
    %89 = vector.shape_cast %88 : vector<16xf32> to vector<16x1xf32>
    %cst_32 = arith.constant 1.280000e+02 : f32
    %90 = vector.broadcast %cst_32 : f32 to vector<16x1xf32>
    %91 = arith.divf %89, %90 : vector<16x1xf32>
    %92 = arith.mulf %87, %87 : vector<16x128xf32>
    %cst_33 = arith.constant dense<0.000000e+00> : vector<16xf32>
    %93 = vector.multi_reduction <add>, %92, %cst_33 [1] : vector<16x128xf32> to vector<16xf32>
    %94 = vector.shape_cast %93 : vector<16xf32> to vector<16x1xf32>
    %cst_34 = arith.constant 1.280000e+02 : f32
    %95 = vector.broadcast %cst_34 : f32 to vector<16x1xf32>
    %96 = arith.divf %94, %95 : vector<16x1xf32>
    %97 = arith.mulf %91, %91 : vector<16x1xf32>
    %98 = arith.subf %96, %97 : vector<16x1xf32>
    %cst_35 = arith.constant 0.000000e+00 : f32
    %99 = vector.broadcast %cst_35 : f32 to vector<16x1xf32>
    %100 = arith.maximumf %98, %99 : vector<16x1xf32>
    %101 = vector.broadcast %91 : vector<16x1xf32> to vector<16x128xf32>
    %102 = arith.subf %87, %101 : vector<16x128xf32>
    %cst_36 = arith.constant 9.99999974E-6 : f32
    %103 = vector.broadcast %cst_36 : f32 to vector<16x1xf32>
    %104 = arith.addf %100, %103 : vector<16x1xf32>
    %105 = math.rsqrt %104 : vector<16x1xf32>
    %106 = vector.broadcast %105 : vector<16x1xf32> to vector<16x128xf32>
    %107 = arith.mulf %102, %106 : vector<16x128xf32>
    %c0_37 = arith.constant 0 : index
    %c0_38 = arith.constant 0 : index
    %108 = vector.load %arg9[%c0_37, %c0_38] : memref<1x128xf32, #tpu.memory_space<vmem>>, vector<1x128xf32>
    %109 = vector.broadcast %108 : vector<1x128xf32> to vector<16x128xf32>
    %110 = arith.mulf %107, %109 : vector<16x128xf32>
    %c0_39 = arith.constant 0 : index
    %c0_40 = arith.constant 0 : index
    %111 = vector.load %arg10[%c0_39, %c0_40] : memref<1x128xf32, #tpu.memory_space<vmem>>, vector<1x128xf32>
    %112 = vector.broadcast %111 : vector<1x128xf32> to vector<16x128xf32>
    %113 = arith.addf %110, %112 : vector<16x128xf32>
    %114 = arith.truncf %113 : vector<16x128xf32> to vector<16x128xbf16>
    %c0_41 = arith.constant 0 : index
    %c0_42 = arith.constant 0 : index
    %115 = vector.load %arg11[%c0_41, %c0_42] : memref<128x128xbf16, #tpu.memory_space<vmem>>, vector<128x128xbf16>
    %cst_43 = arith.constant dense<0.000000e+00> : vector<16x128xf32>
    %116 = tpu.matmul %114, %115, %cst_43 {dimension_numbers = #tpu.dot_dimension_numbers<[1], [0], [0], [1], [0, 0, 1, 1], [], []>} : vector<16x128xbf16>, vector<128x128xbf16>, vector<16x128xf32> -> vector<16x128xf32>
    %c0_44 = arith.constant 0 : index
    %c0_45 = arith.constant 0 : index
    %117 = vector.load %arg12[%c0_44, %c0_45] : memref<1x128xf32, #tpu.memory_space<vmem>>, vector<1x128xf32>
    %118 = vector.broadcast %117 : vector<1x128xf32> to vector<16x128xf32>
    %119 = arith.addf %116, %118 : vector<16x128xf32>
    %120 = vector.shape_cast %119 : vector<16x128xf32> to vector<1x16x128xf32>
    %c0_46 = arith.constant 0 : index
    %c0_47 = arith.constant 0 : index
    %c0_48 = arith.constant 0 : index
    %121 = vector.load %arg13[%c0_46, %c0_47, %c0_48] : memref<1x16x128xf32, #tpu.memory_space<vmem>>, vector<1x16x128xf32>
    tpu.vector_store %arg13[%c0_46, %c0_47, %c0_48], %120 {strides = array<i32>} : memref<1x16x128xf32, #tpu.memory_space<vmem>>, vector<1x16x128xf32>,
    return
  }
  func.func @transform_0(%arg0: i32) -> (i32, i32) {
    %c0_i32 = arith.constant 0 : i32
    %c0_i32_0 = arith.constant 0 : i32
    %c0_i32_1 = arith.constant 0 : i32
    return %c0_i32, %c0_i32_0 : i32, i32
  }
  func.func @transform_1(%arg0: i32) -> (i32, i32, i32) {
    %c0_i32 = arith.constant 0 : i32
    %c0_i32_0 = arith.constant 0 : i32
    %c0_i32_1 = arith.constant 0 : i32
    return %arg0, %c0_i32, %c0_i32_0 : i32, i32, i32
  }
  func.func @transform_2(%arg0: i32) -> (i32, i32, i32) {
    %c0_i32 = arith.constant 0 : i32
    %c0_i32_0 = arith.constant 0 : i32
    %c0_i32_1 = arith.constant 0 : i32
    return %arg0, %c0_i32, %c0_i32_0 : i32, i32, i32
  }
  func.func @transform_3(%arg0: i32) -> (i32, i32) {
    %c0_i32 = arith.constant 0 : i32
    %c0_i32_0 = arith.constant 0 : i32
    %c0_i32_1 = arith.constant 0 : i32
    return %c0_i32, %c0_i32_0 : i32, i32
  }
  func.func @transform_4(%arg0: i32) -> (i32, i32) {
    %c0_i32 = arith.constant 0 : i32
    %c0_i32_0 = arith.constant 0 : i32
    %c0_i32_1 = arith.constant 0 : i32
    return %c0_i32, %c0_i32_0 : i32, i32
  }
  func.func @transform_5(%arg0: i32) -> (i32, i32) {
    %c0_i32 = arith.constant 0 : i32
    %c0_i32_0 = arith.constant 0 : i32
    %c0_i32_1 = arith.constant 0 : i32
    return %c0_i32, %c0_i32_0 : i32, i32
  }
  func.func @transform_6(%arg0: i32) -> (i32, i32) {
    %c0_i32 = arith.constant 0 : i32
    %c0_i32_0 = arith.constant 0 : i32
    %c0_i32_1 = arith.constant 0 : i32
    return %c0_i32, %c0_i32_0 : i32, i32
  }
  func.func @transform_7(%arg0: i32) -> (i32, i32) {
    %c0_i32 = arith.constant 0 : i32
    %c0_i32_0 = arith.constant 0 : i32
    %c0_i32_1 = arith.constant 0 : i32
    return %c0_i32, %c0_i32_0 : i32, i32
  }
  func.func @transform_8(%arg0: i32) -> (i32, i32) {
    %c0_i32 = arith.constant 0 : i32
    %c0_i32_0 = arith.constant 0 : i32
    %c0_i32_1 = arith.constant 0 : i32
    return %c0_i32, %c0_i32_0 : i32, i32
  }
  func.func @transform_9(%arg0: i32) -> (i32, i32) {
    %c0_i32 = arith.constant 0 : i32
    %c0_i32_0 = arith.constant 0 : i32
    %c0_i32_1 = arith.constant 0 : i32
    return %c0_i32, %c0_i32_0 : i32, i32
  }
  func.func @transform_10(%arg0: i32) -> (i32, i32) {
    %c0_i32 = arith.constant 0 : i32
    %c0_i32_0 = arith.constant 0 : i32
    %c0_i32_1 = arith.constant 0 : i32
    return %c0_i32, %c0_i32_0 : i32, i32
  }
  func.func @transform_11(%arg0: i32) -> (i32, i32) {
    %c0_i32 = arith.constant 0 : i32
    %c0_i32_0 = arith.constant 0 : i32
    %c0_i32_1 = arith.constant 0 : i32
    return %c0_i32, %c0_i32_0 : i32, i32
  }
  func.func @transform_12(%arg0: i32) -> (i32, i32, i32) {
    %c0_i32 = arith.constant 0 : i32
    %c0_i32_0 = arith.constant 0 : i32
    %c0_i32_1 = arith.constant 0 : i32
    return %arg0, %c0_i32, %c0_i32_0 : i32, i32, i32
  }
}

</mosaic_0001>

<llo_original>
// kernel: custom-call.49
$region0: #{custom-call.49}
  %s0 = inlined_call_operand.vmem [shape: f32[16,2,2,64], index: 0, kind: output, shape index: {}]

// kernel: custom-call.30
$region0: #{custom-call.30}
  %s0 = inlined_call_operand.vmem [shape: f32[2,2,64], index: 0, kind: output, shape index: {}]

// kernel: _forward_core.1
$region0: #{_forward_core.1}
  #allocation0 [shape = 'u32[]', space=smem, size = 0x4, offset = 0x4, fixed_abs, tag = 'smem constant byte address 0x4 - core index']
  #allocation1 [shape = 'u32[144,128]{1,0:T(1,128)}', space=vmem, size = 0x12000, scoped, tag = 'internal scratch']
  %s0 = inlined_call_operand.vmem [shape: f32[16,128], index: 0, kind: input, shape index: {}]
  %s1 = inlined_call_operand.vmem [shape: f32[2,1,128], index: 1, kind: input, shape index: {}]
  %s2 = inlined_call_operand.vmem [shape: f32[2,16,128], index: 2, kind: input, shape index: {}]
  %s3 = inlined_call_operand.vmem [shape: bf16[128,384], index: 3, kind: input, shape index: {}]
  %s4 = inlined_call_operand.vmem [shape: f32[1,384], index: 4, kind: input, shape index: {}]
  %s5 = inlined_call_operand.vmem [shape: bf16[128,256], index: 5, kind: input, shape index: {}]
  %s6 = inlined_call_operand.vmem [shape: bf16[128,128], index: 6, kind: input, shape index: {}]
  %s7 = inlined_call_operand.vmem [shape: f32[1,128], index: 7, kind: input, shape index: {}]
  %s8 = inlined_call_operand.vmem [shape: f32[1,128], index: 8, kind: input, shape index: {}]
  %s9 = inlined_call_operand.vmem [shape: f32[1,128], index: 9, kind: input, shape index: {}]
  %s10 = inlined_call_operand.vmem [shape: bf16[128,128], index: 10, kind: input, shape index: {}]
  %s11 = inlined_call_operand.vmem [shape: f32[1,128], index: 11, kind: input, shape index: {}]
  %s12 = inlined_call_operand.vmem [shape: f32[2,16,128], index: 12, kind: output, shape index: {}]
  %s13 = sld [smem:[#allocation0]]
  $region81: #{_forward_core.1} parent=0
    _
  %s15 = ssub.s32 1, %s13
  %s16 = scalar_select 0, %s15, %s13
  loop: start=0, step=1, limit=4
  $region2: #{_forward_core.1} parent=0 // loop_pre_header
    _
  $region3: #{_forward_core.1} parent=0 // loop_header
    %s18 = sphi 0, %s22
    %p19 = scmp.ge.s32.totalorder %s18, 4
    %s26 = sphi 0, %s26
    %s28 = sphi 0, %s26
    %s29 = sphi 0, %s28
    %s43 = sphi 0, %s29
    %s49 = sphi 0, %s51
    %s52 = sphi 0, %s49
    %s53 = sphi 0, %s52
    %s69 = sphi 0, %s53
    %s75 = sphi 0, %s77
    %s78 = sphi 0, %s75
    %s79 = sphi 0, %s78
    %s95 = sphi 0, %s79
    %s99 = sphi 0, %s99
    %s101 = sphi 0, %s99
    %s102 = sphi 0, %s101
    %s116 = sphi 0, %s102
    %s120 = sphi 0, %s120
    %s122 = sphi 0, %s120
    %s123 = sphi 0, %s122
    %s137 = sphi 0, %s123
    %s141 = sphi 0, %s141
    %s143 = sphi 0, %s141
    %s144 = sphi 0, %s143
    %s158 = sphi 0, %s144
    %s162 = sphi 0, %s162
    %s164 = sphi 0, %s162
    %s165 = sphi 0, %s164
    %s179 = sphi 0, %s165
    %s183 = sphi 0, %s183
    %s185 = sphi 0, %s183
    %s186 = sphi 0, %s185
    %s200 = sphi 0, %s186
    %s204 = sphi 0, %s204
    %s206 = sphi 0, %s204
    %s207 = sphi 0, %s206
    %s221 = sphi 0, %s207
    %s225 = sphi 0, %s225
    %s227 = sphi 0, %s225
    %s228 = sphi 0, %s227
    %s242 = sphi 0, %s228
    %s246 = sphi 0, %s246
    %s248 = sphi 0, %s246
    %s249 = sphi 0, %s248
    %s263 = sphi 0, %s249
    %s267 = sphi 0, %s267
    %s269 = sphi 0, %s267
    %s270 = sphi 0, %s269
    %s284 = sphi 0, %s270
    %s290 = sphi 0, %s292
    %s293 = sphi 0, %s290
    %s294 = sphi 0, %s293
    %s310 = sphi 0, %s294
  $region4: #{_forward_core.1} parent=0 // loop_header_branch
    %21 = sbr.rel (%p19) target = $region8
  $region5: #{_forward_core.1} parent=0 // loop_body
    %s23 = ssub.s32 %s18, 1
    %s24 = ssub.s32 %s18, 2
    %s25 = sadd.s32 %s18, 1
    %s27 = sadd.s32 %s26, 1
    %p30 = scmp.eq.s32.totalorder %s18, 1
    %p31 = scmp.ne.s32.totalorder %s26, %s28
    %p32 = scmp.eq.s32.totalorder %s18, 0
    %p33 = por %p31, %p32
    %p34 = scmp.ne.s32.totalorder %s26, %s28
    %p35 = scmp.eq.s32.totalorder %s23, 1
    %p36 = por %p34, %p35
    %p37 = scmp.ne.s32.totalorder %s28, %s29
    %p38 = scmp.eq.s32.totalorder %s23, 0
    %p39 = por %p37, %p38
    %p40 = scmp.ne.s32.totalorder %s28, %s29
    %p41 = scmp.eq.s32.totalorder %s24, 1
    %p42 = por %p40, %p41
    %p44 = scmp.ne.s32.totalorder %s29, %s43
    %p45 = scmp.eq.s32.totalorder %s24, 0
    %p46 = por %p44, %p45
    %s47 = ssub.s32 %s18, %s25
    %p48 = scmp.eq.s32.totalorder %s47, 0
    %s50 = sadd.s32 %s49, 1
    %s51 = scalar_select %p48, %s49, %s50
    %p54 = pneg %p48
    %p55 = scmp.eq.s32.totalorder %s18, 1
    %p56 = por %p54, %p55
    %p57 = scmp.ne.s32.totalorder %s49, %s52
    %p58 = scmp.eq.s32.totalorder %s18, 0
    %p59 = por %p57, %p58
    %p60 = scmp.ne.s32.totalorder %s49, %s52
    %p61 = scmp.eq.s32.totalorder %s23, 1
    %p62 = por %p60, %p61
    %p63 = scmp.ne.s32.totalorder %s52, %s53
    %p64 = scmp.eq.s32.totalorder %s23, 0
    %p65 = por %p63, %p64
    %p66 = scmp.ne.s32.totalorder %s52, %s53
    %p67 = scmp.eq.s32.totalorder %s24, 1
    %p68 = por %p66, %p67
    %p70 = scmp.ne.s32.totalorder %s53, %s69
    %p71 = scmp.eq.s32.totalorder %s24, 0
    %p72 = por %p70, %p71
    %s73 = ssub.s32 %s18, %s25
    %p74 = scmp.eq.s32.totalorder %s73, 0
    %s76 = sadd.s32 %s75, 1
    %s77 = scalar_select %p74, %s75, %s76
    %p80 = pneg %p74
    %p81 = scmp.eq.s32.totalorder %s18, 1
    %p82 = por %p80, %p81
    %p83 = scmp.ne.s32.totalorder %s75, %s78
    %p84 = scmp.eq.s32.totalorder %s18, 0
    %p85 = por %p83, %p84
    %p86 = scmp.ne.s32.totalorder %s75, %s78
    %p87 = scmp.eq.s32.totalorder %s23, 1
    %p88 = por %p86, %p87
    %p89 = scmp.ne.s32.totalorder %s78, %s79
    %p90 = scmp.eq.s32.totalorder %s23, 0
    %p91 = por %p89, %p90
    %p92 = scmp.ne.s32.totalorder %s78, %s79
    %p93 = scmp.eq.s32.totalorder %s24, 1
    %p94 = por %p92, %p93
    %p96 = scmp.ne.s32.totalorder %s79, %s95
    %p97 = scmp.eq.s32.totalorder %s24, 0
    %p98 = por %p96, %p97
    %s100 = sadd.s32 %s99, 1
    %p103 = scmp.eq.s32.totalorder %s18, 1
    %p104 = scmp.ne.s32.totalorder %s99, %s101
    %p105 = scmp.eq.s32.totalorder %s18, 0
    %p106 = por %p104, %p105
    %p107 = scmp.ne.s32.totalorder %s99, %s101
    %p108 = scmp.eq.s32.totalorder %s23, 1
    %p109 = por %p107, %p108
    %p110 = scmp.ne.s32.totalorder %s101, %s102
    %p111 = scmp.eq.s32.totalorder %s23, 0
    %p112 = por %p110, %p111
    %p113 = scmp.ne.s32.totalorder %s101, %s102
    %p114 = scmp.eq.s32.totalorder %s24, 1
    %p115 = por %p113, %p114
    %p117 = scmp.ne.s32.totalorder %s102, %s116
    %p118 = scmp.eq.s32.totalorder %s24, 0
    %p119 = por %p117, %p118
    %s121 = sadd.s32 %s120, 1
    %p124 = scmp.eq.s32.totalorder %s18, 1
    %p125 = scmp.ne.s32.totalorder %s120, %s122
    %p126 = scmp.eq.s32.totalorder %s18, 0
    %p127 = por %p125, %p126
    %p128 = scmp.ne.s32.totalorder %s120, %s122
    %p129 = scmp.eq.s32.totalorder %s23, 1
    %p130 = por %p128, %p129
    %p131 = scmp.ne.s32.totalorder %s122, %s123
    %p132 = scmp.eq.s32.totalorder %s23, 0
    %p133 = por %p131, %p132
    %p134 = scmp.ne.s32.totalorder %s122, %s123
    %p135 = scmp.eq.s32.totalorder %s24, 1
    %p136 = por %p134, %p135
    %p138 = scmp.ne.s32.totalorder %s123, %s137
    %p139 = scmp.eq.s32.totalorder %s24, 0
    %p140 = por %p138, %p139
    %s142 = sadd.s32 %s141, 1
    %p145 = scmp.eq.s32.totalorder %s18, 1
    %p146 = scmp.ne.s32.totalorder %s141, %s143
    %p147 = scmp.eq.s32.totalorder %s18, 0
    %p148 = por %p146, %p147
    %p149 = scmp.ne.s32.totalorder %s141, %s143
    %p150 = scmp.eq.s32.totalorder %s23, 1
    %p151 = por %p149, %p150
    %p152 = scmp.ne.s32.totalorder %s143, %s144
    %p153 = scmp.eq.s32.totalorder %s23, 0
    %p154 = por %p152, %p153
    %p155 = scmp.ne.s32.totalorder %s143, %s144
    %p156 = scmp.eq.s32.totalorder %s24, 1
    %p157 = por %p155, %p156
    %p159 = scmp.ne.s32.totalorder %s144, %s158
    %p160 = scmp.eq.s32.totalorder %s24, 0
    %p161 = por %p159, %p160
    %s163 = sadd.s32 %s162, 1
    %p166 = scmp.eq.s32.totalorder %s18, 1
    %p167 = scmp.ne.s32.totalorder %s162, %s164
    %p168 = scmp.eq.s32.totalorder %s18, 0
    %p169 = por %p167, %p168
    %p170 = scmp.ne.s32.totalorder %s162, %s164
    %p171 = scmp.eq.s32.totalorder %s23, 1
    %p172 = por %p170, %p171
    %p173 = scmp.ne.s32.totalorder %s164, %s165
    %p174 = scmp.eq.s32.totalorder %s23, 0
    %p175 = por %p173, %p174
    %p176 = scmp.ne.s32.totalorder %s164, %s165
    %p177 = scmp.eq.s32.totalorder %s24, 1
    %p178 = por %p176, %p177
    %p180 = scmp.ne.s32.totalorder %s165, %s179
    %p181 = scmp.eq.s32.totalorder %s24, 0
    %p182 = por %p180, %p181
    %s184 = sadd.s32 %s183, 1
    %p187 = scmp.eq.s32.totalorder %s18, 1
    %p188 = scmp.ne.s32.totalorder %s183, %s185
    %p189 = scmp.eq.s32.totalorder %s18, 0
    %p190 = por %p188, %p189
    %p191 = scmp.ne.s32.totalorder %s183, %s185
    %p192 = scmp.eq.s32.totalorder %s23, 1
    %p193 = por %p191, %p192
    %p194 = scmp.ne.s32.totalorder %s185, %s186
    %p195 = scmp.eq.s32.totalorder %s23, 0
    %p196 = por %p194, %p195
    %p197 = scmp.ne.s32.totalorder %s185, %s186
    %p198 = scmp.eq.s32.totalorder %s24, 1
    %p199 = por %p197, %p198
    %p201 = scmp.ne.s32.totalorder %s186, %s200
    %p202 = scmp.eq.s32.totalorder %s24, 0
    %p203 = por %p201, %p202
    %s205 = sadd.s32 %s204, 1
    %p208 = scmp.eq.s32.totalorder %s18, 1
    %p209 = scmp.ne.s32.totalorder %s204, %s206
    %p210 = scmp.eq.s32.totalorder %s18, 0
    %p211 = por %p209, %p210
    %p212 = scmp.ne.s32.totalorder %s204, %s206
    %p213 = scmp.eq.s32.totalorder %s23, 1
    %p214 = por %p212, %p213
    %p215 = scmp.ne.s32.totalorder %s206, %s207
    %p216 = scmp.eq.s32.totalorder %s23, 0
    %p217 = por %p215, %p216
    %p218 = scmp.ne.s32.totalorder %s206, %s207
    %p219 = scmp.eq.s32.totalorder %s24, 1
    %p220 = por %p218, %p219
    %p222 = scmp.ne.s32.totalorder %s207, %s221
    %p223 = scmp.eq.s32.totalorder %s24, 0
    %p224 = por %p222, %p223
    %s226 = sadd.s32 %s225, 1
    %p229 = scmp.eq.s32.totalorder %s18, 1
    %p230 = scmp.ne.s32.totalorder %s225, %s227
    %p231 = scmp.eq.s32.totalorder %s18, 0
    %p232 = por %p230, %p231
    %p233 = scmp.ne.s32.totalorder %s225, %s227
    %p234 = scmp.eq.s32.totalorder %s23, 1
    %p235 = por %p233, %p234
    %p236 = scmp.ne.s32.totalorder %s227, %s228
    %p237 = scmp.eq.s32.totalorder %s23, 0
    %p238 = por %p236, %p237
    %p239 = scmp.ne.s32.totalorder %s227, %s228
    %p240 = scmp.eq.s32.totalorder %s24, 1
    %p241 = por %p239, %p240
    %p243 = scmp.ne.s32.totalorder %s228, %s242
    %p244 = scmp.eq.s32.totalorder %s24, 0
    %p245 = por %p243, %p244
    %s247 = sadd.s32 %s246, 1
    %p250 = scmp.eq.s32.totalorder %s18, 1
    %p251 = scmp.ne.s32.totalorder %s246, %s248
    %p252 = scmp.eq.s32.totalorder %s18, 0
    %p253 = por %p251, %p252
    %p254 = scmp.ne.s32.totalorder %s246, %s248
    %p255 = scmp.eq.s32.totalorder %s23, 1
    %p256 = por %p254, %p255
    %p257 = scmp.ne.s32.totalorder %s248, %s249
    %p258 = scmp.eq.s32.totalorder %s23, 0
    %p259 = por %p257, %p258
    %p260 = scmp.ne.s32.totalorder %s248, %s249
    %p261 = scmp.eq.s32.totalorder %s24, 1
    %p262 = por %p260, %p261
    %p264 = scmp.ne.s32.totalorder %s249, %s263
    %p265 = scmp.eq.s32.totalorder %s24, 0
    %p266 = por %p264, %p265
    %s268 = sadd.s32 %s267, 1
    %p271 = scmp.eq.s32.totalorder %s18, 1
    %p272 = scmp.ne.s32.totalorder %s267, %s269
    %p273 = scmp.eq.s32.totalorder %s18, 0
    %p274 = por %p272, %p273
    %p275 = scmp.ne.s32.totalorder %s267, %s269
    %p276 = scmp.eq.s32.totalorder %s23, 1
    %p277 = por %p275, %p276
    %p278 = scmp.ne.s32.totalorder %s269, %s270
    %p279 = scmp.eq.s32.totalorder %s23, 0
    %p280 = por %p278, %p279
    %p281 = scmp.ne.s32.totalorder %s269, %s270
    %p282 = scmp.eq.s32.totalorder %s24, 1
    %p283 = por %p281, %p282
    %p285 = scmp.ne.s32.totalorder %s270, %s284
    %p286 = scmp.eq.s32.totalorder %s24, 0
    %p287 = por %p285, %p286
    %s288 = ssub.s32 %s18, %s25
    %p289 = scmp.eq.s32.totalorder %s288, 0
    %s291 = sadd.s32 %s290, 1
    %s292 = scalar_select %p289, %s290, %s291
    %p295 = pneg %p289
    %p296 = scmp.eq.s32.totalorder %s18, 1
    %p297 = por %p295, %p296
    %p298 = scmp.ne.s32.totalorder %s290, %s293
    %p299 = scmp.eq.s32.totalorder %s18, 0
    %p300 = por %p298, %p299
    %p301 = scmp.ne.s32.totalorder %s290, %s293
    %p302 = scmp.eq.s32.totalorder %s23, 1
    %p303 = por %p301, %p302
    %p304 = scmp.ne.s32.totalorder %s293, %s294
    %p305 = scmp.eq.s32.totalorder %s23, 0
    %p306 = por %p304, %p305
    %p307 = scmp.ne.s32.totalorder %s293, %s294
    %p308 = scmp.eq.s32.totalorder %s24, 1
    %p309 = por %p307, %p308
    %p311 = scmp.ne.s32.totalorder %s294, %s310
    %p312 = scmp.eq.s32.totalorder %s24, 0
    %p313 = por %p311, %p312
    %p314 = scmp.le.s32.totalorder 1, %s18
    %p315 = scmp.lt.s32.totalorder %s18, 3
    %p316 = pnand %p314, %p315
    %p317 = pneg %p316
    // Predicated region
    $region9: #{_forward_core.1} parent=5 // pred_check
      _
    $region10: #{_forward_core.1} parent=5 // pred_check_branch
      %319 = sbr.rel (%p316) target = $region12
    $region11: #{_forward_core.1} parent=5 // pred_region
      %s320 = ssub.s32 %s18, 1
      // Predicated region
      $region13: #{_forward_core.1} parent=11 // pred_check
        %p321 = pneg %p39
      $region14: #{_forward_core.1} parent=11 // pred_check_branch
        %323 = sbr.rel (%p321) target = $region16
      $region15: #{_forward_core.1} parent=11 // pred_region
        _
      $region16: #{_forward_core.1} parent=11 // pred_fallthru
        _
      // Predicated region
      $region17: #{_forward_core.1} parent=11 // pred_check
        %p324 = pneg %p112
      $region18: #{_forward_core.1} parent=11 // pred_check_branch
        %326 = sbr.rel (%p324) target = $region20
      $region19: #{_forward_core.1} parent=11 // pred_region
        _
      $region20: #{_forward_core.1} parent=11 // pred_fallthru
        _
      // Predicated region
      $region21: #{_forward_core.1} parent=11 // pred_check
        %p327 = pneg %p133
      $region22: #{_forward_core.1} parent=11 // pred_check_branch
        %329 = sbr.rel (%p327) target = $region24
      $region23: #{_forward_core.1} parent=11 // pred_region
        _
      $region24: #{_forward_core.1} parent=11 // pred_fallthru
        _
      // Predicated region
      $region25: #{_forward_core.1} parent=11 // pred_check
        %p330 = pneg %p154
      $region26: #{_forward_core.1} parent=11 // pred_check_branch
        %332 = sbr.rel (%p330) target = $region28
      $region27: #{_forward_core.1} parent=11 // pred_region
        _
      $region28: #{_forward_core.1} parent=11 // pred_fallthru
        _
      // Predicated region
      $region29: #{_forward_core.1} parent=11 // pred_check
        %p333 = pneg %p175
      $region30: #{_forward_core.1} parent=11 // pred_check_branch
        %335 = sbr.rel (%p333) target = $region32
      $region31: #{_forward_core.1} parent=11 // pred_region
        _
      $region32: #{_forward_core.1} parent=11 // pred_fallthru
        _
      // Predicated region
      $region33: #{_forward_core.1} parent=11 // pred_check
        %p336 = pneg %p196
      $region34: #{_forward_core.1} parent=11 // pred_check_branch
        %338 = sbr.rel (%p336) target = $region36
      $region35: #{_forward_core.1} parent=11 // pred_region
        _
      $region36: #{_forward_core.1} parent=11 // pred_fallthru
        _
      // Predicated region
      $region37: #{_forward_core.1} parent=11 // pred_check
        %p339 = pneg %p217
      $region38: #{_forward_core.1} parent=11 // pred_check_branch
        %341 = sbr.rel (%p339) target = $region40
      $region39: #{_forward_core.1} parent=11 // pred_region
        _
      $region40: #{_forward_core.1} parent=11 // pred_fallthru
        _
      // Predicated region
      $region41: #{_forward_core.1} parent=11 // pred_check
        %p342 = pneg %p238
      $region42: #{_forward_core.1} parent=11 // pred_check_branch
        %344 = sbr.rel (%p342) target = $region44
      $region43: #{_forward_core.1} parent=11 // pred_region
        _
      $region44: #{_forward_core.1} parent=11 // pred_fallthru
        _
      // Predicated region
      $region45: #{_forward_core.1} parent=11 // pred_check
        %p345 = pneg %p259
      $region46: #{_forward_core.1} parent=11 // pred_check_branch
        %347 = sbr.rel (%p345) target = $region48
      $region47: #{_forward_core.1} parent=11 // pred_region
        _
      $region48: #{_forward_core.1} parent=11 // pred_fallthru
        _
      // Predicated region
      $region49: #{_forward_core.1} parent=11 // pred_check
        %p348 = pneg %p280
      $region50: #{_forward_core.1} parent=11 // pred_check_branch
        %350 = sbr.rel (%p348) target = $region52
      $region51: #{_forward_core.1} parent=11 // pred_region
        _
      $region52: #{_forward_core.1} parent=11 // pred_fallthru
        _
    $region12: #{_forward_core.1} parent=5 // pred_fallthru
      _
    %p351 = scmp.lt.s32.totalorder %s18, 2
    // Predicated region
    $region53: #{_forward_core.1} parent=5 // pred_check
      %p352 = pneg %p351
    $region54: #{_forward_core.1} parent=5 // pred_check_branch
      %354 = sbr.rel (%p352) target = $region56
    $region55: #{_forward_core.1} parent=5 // pred_region
      // Predicated region
      $region57: #{_forward_core.1} parent=55 // pred_check
        %p355 = pneg %p59
      $region58: #{_forward_core.1} parent=55 // pred_check_branch
        %357 = sbr.rel (%p355) target = $region60
      $region59: #{_forward_core.1} parent=55 // pred_region
        %p358 = scmp.lt.s32.totalorder %s18, 1
        %s359 = scalar_select %p358, %s18, 1
        %s360 = scalar_lea.vmem %s1, %s359
      $region60: #{_forward_core.1} parent=55 // pred_fallthru
        _
      // Predicated region
      $region61: #{_forward_core.1} parent=55 // pred_check
        %p361 = pneg %p85
      $region62: #{_forward_core.1} parent=55 // pred_check_branch
        %363 = sbr.rel (%p361) target = $region64
      $region63: #{_forward_core.1} parent=55 // pred_region
        %p364 = scmp.lt.s32.totalorder %s18, 1
        %s365 = scalar_select %p364, %s18, 1
        %s366 = smul.addr %s365, 2
        %s367 = smul.addr %s366, 8
        %s368 = scalar_lea.vmem %s2, %s367
      $region64: #{_forward_core.1} parent=55 // pred_fallthru
        _
    $region56: #{_forward_core.1} parent=5 // pred_fallthru
      _
    %p369 = scmp.le.s32.totalorder 1, %s18
    %p370 = scmp.lt.s32.totalorder %s18, 3
    %p371 = pnand %p369, %p370
    %p372 = pneg %p371
    // Predicated region
    $region65: #{_forward_core.1} parent=5 // pred_check
      _
    $region66: #{_forward_core.1} parent=5 // pred_check_branch
      %374 = sbr.rel (%p371) target = $region68
    $region67: #{_forward_core.1} parent=5 // pred_region
      %s375 = ssub.s32 %s18, 1
      %p376 = pneg %p39
      %p377 = pneg %p36
      %p378 = scmp.lt.s32.totalorder %s23, 1
      %s379 = scalar_select %p378, %s23, 1
      %s380 = scalar_lea.vmem %s1, %s379
      %p381 = pneg %p65
      %p382 = pneg %p62
      %p383 = scmp.lt.s32.totalorder %s23, 1
      %s384 = scalar_select %p383, %s23, 1
      %s385 = smul.addr %s384, 2
      %s386 = smul.addr %s385, 8
      %s387 = scalar_lea.vmem %s2, %s386
      %p388 = pneg %p91
      %p389 = pneg %p88
      %p390 = pneg %p112
      %p391 = pneg %p109
      %p392 = pneg %p133
      %p393 = pneg %p130
      %p394 = pneg %p154
      %p395 = pneg %p151
      %p396 = pneg %p175
      %p397 = pneg %p172
      %p398 = pneg %p196
      %p399 = pneg %p193
      %p400 = pneg %p217
      %p401 = pneg %p214
      %p402 = pneg %p238
      %p403 = pneg %p235
      %p404 = pneg %p259
      %p405 = pneg %p256
      %p406 = pneg %p280
      %p407 = pneg %p277
      %p408 = pneg %p306
      %p409 = pneg %p303
      %p410 = scmp.lt.s32.totalorder %s23, 1
      %s411 = scalar_select %p410, %s23, 1
      %s412 = smul.addr %s411, 2
      %s413 = smul.addr %s412, 8
      %s414 = scalar_lea.vmem %s12, %s413
      %p415 = scmp.lt.s32.totalorder %s23, 1
      %s416 = scalar_select %p415, %s23, 1
      %s417 = scalar_lea.vmem %s1, %s416
      %p418 = scmp.lt.s32.totalorder %s23, 1
      %s419 = scalar_select %p418, %s23, 1
      %s420 = smul.addr %s419, 2
      %s421 = smul.addr %s420, 8
      %s422 = scalar_lea.vmem %s2, %s421
      %p423 = scmp.lt.s32.totalorder %s23, 1
      %s424 = scalar_select %p423, %s23, 1
      %s425 = smul.addr %s424, 2
      %s426 = smul.addr %s425, 8
      %s427 = scalar_lea.vmem %s12, %s426
      %v429 = vld [vmem:[%s422] sm:$0xff]
      %v430 = vld [vmem:[%s422 + $0x8] sm:$0xff]
      %v431 = vpack.c.bf16 %v430, %v429
      %v432 = vld [vmem:[%s3] sm:$0xff]
      %v433 = vld [vmem:[%s3 + $0x8] sm:$0xf]
      %v434 = vld [vmem:[%s3 + $0xc] sm:$0xff]
      %v435 = vld [vmem:[%s3 + $0x14] sm:$0xf]
      %v436 = vld [vmem:[%s3 + $0x18] sm:$0xff]
      %v437 = vld [vmem:[%s3 + $0x20] sm:$0xf]
      %v438 = vld [vmem:[%s3 + $0x24] sm:$0xff]
      %v439 = vld [vmem:[%s3 + $0x2c] sm:$0xf]
      %v440 = vld [vmem:[%s3 + $0x30] sm:$0xff]
      %v441 = vld [vmem:[%s3 + $0x38] sm:$0xf]
      %v442 = vld [vmem:[%s3 + $0x3c] sm:$0xff]
      %v443 = vld [vmem:[%s3 + $0x44] sm:$0xf]
      %v444 = vld [vmem:[%s3 + $0x48] sm:$0xff]
      %v445 = vld [vmem:[%s3 + $0x50] sm:$0xf]
      %v446 = vld [vmem:[%s3 + $0x54] sm:$0xff]
      %v447 = vld [vmem:[%s3 + $0x5c] sm:$0xf]
      %v448 = vld [vmem:[%s3 + $0x60] sm:$0xff]
      %v449 = vld [vmem:[%s3 + $0x68] sm:$0xf]
      %v450 = vld [vmem:[%s3 + $0x6c] sm:$0xff]
      %v451 = vld [vmem:[%s3 + $0x74] sm:$0xf]
      %v452 = vld [vmem:[%s3 + $0x78] sm:$0xff]
      %v453 = vld [vmem:[%s3 + $0x80] sm:$0xf]
      %v454 = vld [vmem:[%s3 + $0x84] sm:$0xff]
      %v455 = vld [vmem:[%s3 + $0x8c] sm:$0xf]
      %v456 = vld [vmem:[%s3 + $0x90] sm:$0xff]
      %v457 = vld [vmem:[%s3 + $0x98] sm:$0xf]
      %v458 = vld [vmem:[%s3 + $0x9c] sm:$0xff]
      %v459 = vld [vmem:[%s3 + $0xa4] sm:$0xf]
      %v460 = vld [vmem:[%s3 + $0xa8] sm:$0xff]
      %v461 = vld [vmem:[%s3 + $0xb0] sm:$0xf]
      %v462 = vld [vmem:[%s3 + $0xb4] sm:$0xff]
      %v463 = vld [vmem:[%s3 + $0xbc] sm:$0xf]
      %v464 = vld [vmem:[%s4] sm:$0x7]
      %v466 = vlaneseq
      %v467 = vshrl.u32 %v466, 7
      %v468 = vsub.s32 0, %v467
      %v469 = vrot.slane %v464, %v468
      %v470 = vlaneseq
      %v471 = vshrl.u32 %v470, 7
      %v472 = vsub.s32 1, %v471
      %v473 = vrot.slane %v464, %v472
      %v474 = vlaneseq
      %v475 = vshrl.u32 %v474, 7
      %v476 = vsub.s32 2, %v475
      %v477 = vrot.slane %v464, %v476
      %v513 = vunpack.c.l.b16 %v432
      %v514 = vunpack.c.h.b16 %v432
      %v515 = vunpack.c.l.b16 %v433
      %v516 = vunpack.c.l.b16 %v434
      %v517 = vunpack.c.h.b16 %v434
      %v518 = vunpack.c.l.b16 %v435
      %v519 = vunpack.c.l.b16 %v436
      %v520 = vunpack.c.h.b16 %v436
      %v521 = vunpack.c.l.b16 %v437
      %v522 = vunpack.c.l.b16 %v438
      %v523 = vunpack.c.h.b16 %v438
      %v524 = vunpack.c.l.b16 %v439
      %v525 = vunpack.c.l.b16 %v440
      %v526 = vunpack.c.h.b16 %v440
      %v527 = vunpack.c.l.b16 %v441
      %v528 = vunpack.c.l.b16 %v442
      %v529 = vunpack.c.h.b16 %v442
      %v530 = vunpack.c.l.b16 %v443
      %v531 = vunpack.c.l.b16 %v444
      %v532 = vunpack.c.h.b16 %v444
      %v533 = vunpack.c.l.b16 %v445
      %v534 = vunpack.c.l.b16 %v446
      %v535 = vunpack.c.h.b16 %v446
      %v536 = vunpack.c.l.b16 %v447
      %v537 = vunpack.c.l.b16 %v448
      %v538 = vunpack.c.h.b16 %v448
      %v539 = vunpack.c.l.b16 %v449
      %v540 = vunpack.c.l.b16 %v450
      %v541 = vunpack.c.h.b16 %v450
      %v542 = vunpack.c.l.b16 %v451
      %v543 = vunpack.c.l.b16 %v452
      %v544 = vunpack.c.h.b16 %v452
      %v545 = vunpack.c.l.b16 %v453
      %v546 = vunpack.c.l.b16 %v454
      %v547 = vunpack.c.h.b16 %v454
      %v548 = vunpack.c.l.b16 %v455
      %v549 = vunpack.c.l.b16 %v456
      %v550 = vunpack.c.h.b16 %v456
      %v551 = vunpack.c.l.b16 %v457
      %v552 = vunpack.c.l.b16 %v458
      %v553 = vunpack.c.h.b16 %v458
      %v554 = vunpack.c.l.b16 %v459
      %v555 = vunpack.c.l.b16 %v460
      %v556 = vunpack.c.h.b16 %v460
      %v557 = vunpack.c.l.b16 %v461
      %v558 = vunpack.c.l.b16 %v462
      %v559 = vunpack.c.h.b16 %v462
      %v560 = vunpack.c.l.b16 %v463
      %v561 = vpack.c.b16 %v516, %v513
      %v562 = vpack.c.b16 %v517, %v514
      %v563 = vpack.c.b16 %v518, %v515
      %v564 = vpack.c.b16 %v522, %v519
      %v565 = vpack.c.b16 %v523, %v520
      %v566 = vpack.c.b16 %v524, %v521
      %v567 = vpack.c.b16 %v528, %v525
      %v568 = vpack.c.b16 %v529, %v526
      %v569 = vpack.c.b16 %v530, %v527
      %v570 = vpack.c.b16 %v534, %v531
      %v571 = vpack.c.b16 %v535, %v532
      %v572 = vpack.c.b16 %v536, %v533
      %v573 = vpack.c.b16 %v540, %v537
      %v574 = vpack.c.b16 %v541, %v538
      %v575 = vpack.c.b16 %v542, %v539
      %v576 = vpack.c.b16 %v546, %v543
      %v577 = vpack.c.b16 %v547, %v544
      %v578 = vpack.c.b16 %v548, %v545
      %v579 = vpack.c.b16 %v552, %v549
      %v580 = vpack.c.b16 %v553, %v550
      %v581 = vpack.c.b16 %v554, %v551
      %v582 = vpack.c.b16 %v558, %v555
      %v583 = vpack.c.b16 %v559, %v556
      %v584 = vpack.c.b16 %v560, %v557
      %609 = vmatprep.subr.bf16.mxu0 %v583
      %610 = vmatpush1.bf16.msra.mxu0 %v582
      %611 = vmatprep.subr.bf16.mxu0 %v580
      %612 = vmatpush1.bf16.msra.mxu0 %v579
      %613 = vmatprep.subr.bf16.mxu0 %v577
      %614 = vmatpush1.bf16.msra.mxu0 %v576
      %615 = vmatprep.subr.bf16.mxu0 %v574
      %616 = vmatpush1.bf16.msra.mxu0 %v573
      %617 = vmatprep.subr.bf16.mxu0 %v571
      %618 = vmatpush1.bf16.msra.mxu0 %v570
      %619 = vmatprep.subr.bf16.mxu0 %v568
      %620 = vmatpush1.bf16.msra.mxu0 %v567
      %621 = vmatprep.subr.bf16.mxu0 %v565
      %622 = vmatpush1.bf16.msra.mxu0 %v564
      %623 = vmatprep.subr.bf16.mxu0 %v562
      %624 = vmatpush1.bf16.msra.mxu0 %v561
      %625 = vmatprep.subr.bf16.mxu0 0
      %626 = vmatpush2.bf16.msra.mxu0 0
      %627 = vmatprep.subr.bf16.mxu0 0
      %628 = vmatpush2.bf16.msra.mxu0 0
      %629 = vmatprep.subr.bf16.mxu0 0
      %630 = vmatpush2.bf16.msra.mxu0 0
      %631 = vmatprep.subr.bf16.mxu0 0
      %632 = vmatpush2.bf16.msra.mxu0 0
      %633 = vmatprep.subr.bf16.mxu0 0
      %634 = vmatpush2.bf16.msra.mxu0 0
      %635 = vmatprep.subr.bf16.mxu0 0
      %636 = vmatpush2.bf16.msra.mxu0 0
      %637 = vmatprep.subr.bf16.mxu0 0
      %638 = vmatpush2.bf16.msra.mxu0 0
      %639 = vmatprep.subr.bf16.mxu0 0
      %640 = vmatpush2.bf16.msra.mxu0 0
      %641 = vmatprep.mubr.bf16.mxu0 0
      %642 = vmatmul.mubr.bf16.gmra.mxu0 %v431
      %v643 = vpop.f32.mrf.mxu0
      %v644 = vadd.f32 %v469, %v643
      %v645 = vpop.f32.mrf.mxu0
      %v646 = vadd.f32 %v473, %v645
      %v647 = vpop.f32.mrf.mxu0
      %v648 = vadd.f32 %v469, %v647
      %v649 = vpop.f32.mrf.mxu0
      %v650 = vadd.f32 %v473, %v649
      %651 = vdwg.mxu0
      %652 = vmatprep.subr.bf16.mxu0 0
      %653 = vmatpush1.bf16.msra.mxu0 %v584
      %654 = vmatprep.subr.bf16.mxu0 0
      %655 = vmatpush1.bf16.msra.mxu0 %v581
      %656 = vmatprep.subr.bf16.mxu0 0
      %657 = vmatpush1.bf16.msra.mxu0 %v578
      %658 = vmatprep.subr.bf16.mxu0 0
      %659 = vmatpush1.bf16.msra.mxu0 %v575
      %660 = vmatprep.subr.bf16.mxu0 0
      %661 = vmatpush1.bf16.msra.mxu0 %v572
      %662 = vmatprep.subr.bf16.mxu0 0
      %663 = vmatpush1.bf16.msra.mxu0 %v569
      %664 = vmatprep.subr.bf16.mxu0 0
      %665 = vmatpush1.bf16.msra.mxu0 %v566
      %666 = vmatprep.subr.bf16.mxu0 0
      %667 = vmatpush1.bf16.msra.mxu0 %v563
      %668 = vmatprep.subr.bf16.mxu0 0
      %669 = vmatpush2.bf16.msra.mxu0 0
      %670 = vmatprep.subr.bf16.mxu0 0
      %671 = vmatpush2.bf16.msra.mxu0 0
      %672 = vmatprep.subr.bf16.mxu0 0
      %673 = vmatpush2.bf16.msra.mxu0 0
      %674 = vmatprep.subr.bf16.mxu0 0
      %675 = vmatpush2.bf16.msra.mxu0 0
      %676 = vmatprep.subr.bf16.mxu0 0
      %677 = vmatpush2.bf16.msra.mxu0 0
      %678 = vmatprep.subr.bf16.mxu0 0
      %679 = vmatpush2.bf16.msra.mxu0 0
      %680 = vmatprep.subr.bf16.mxu0 0
      %681 = vmatpush2.bf16.msra.mxu0 0
      %682 = vmatprep.subr.bf16.mxu0 0
      %683 = vmatpush2.bf16.msra.mxu0 0
      %684 = vmatprep.mubr.bf16.mxu0 0
      %685 = vmatmul.mubr.bf16.gmra.mxu0 %v431
      %v686 = vpop.f32.mrf.mxu0
      %v687 = vadd.f32 %v477, %v686
      %v688 = vpop.f32.mrf.mxu0
      %v689 = vpop.f32.mrf.mxu0
      %v690 = vadd.f32 %v477, %v689
      %v691 = vpop.f32.mrf.mxu0
      %692 = vdwg.mxu0
      %v693 = vld [vmem:[%s5] sm:$0xff]
      %v694 = vld [vmem:[%s5 + $0x8] sm:$0xff]
      %v695 = vld [vmem:[%s5 + $0x10] sm:$0xff]
      %v696 = vld [vmem:[%s5 + $0x18] sm:$0xff]
      %v697 = vld [vmem:[%s5 + $0x20] sm:$0xff]
      %v698 = vld [vmem:[%s5 + $0x28] sm:$0xff]
      %v699 = vld [vmem:[%s5 + $0x30] sm:$0xff]
      %v700 = vld [vmem:[%s5 + $0x38] sm:$0xff]
      %v701 = vld [vmem:[%s5 + $0x40] sm:$0xff]
      %v702 = vld [vmem:[%s5 + $0x48] sm:$0xff]
      %v703 = vld [vmem:[%s5 + $0x50] sm:$0xff]
      %v704 = vld [vmem:[%s5 + $0x58] sm:$0xff]
      %v705 = vld [vmem:[%s5 + $0x60] sm:$0xff]
      %v706 = vld [vmem:[%s5 + $0x68] sm:$0xff]
      %v707 = vld [vmem:[%s5 + $0x70] sm:$0xff]
      %v708 = vld [vmem:[%s5 + $0x78] sm:$0xff]
      %v709 = vld [vmem:[%s0] sm:$0xff]
      %v710 = vld [vmem:[%s0 + $0x8] sm:$0xff]
      %v711 = vpack.c.bf16 %v648, %v644
      %v712 = vpack.c.bf16 %v650, %v646
      %v713 = vpack.c.bf16 %v690, %v687
      %v730 = vunpack.c.l.b16 %v693
      %v731 = vunpack.c.l.b16 %v694
      %v732 = vunpack.c.l.b16 %v695
      %v733 = vunpack.c.l.b16 %v696
      %v734 = vunpack.c.l.b16 %v697
      %v735 = vunpack.c.l.b16 %v698
      %v736 = vunpack.c.l.b16 %v699
      %v737 = vunpack.c.l.b16 %v700
      %v738 = vunpack.c.l.b16 %v701
      %v739 = vunpack.c.l.b16 %v702
      %v740 = vunpack.c.l.b16 %v703
      %v741 = vunpack.c.l.b16 %v704
      %v742 = vunpack.c.l.b16 %v705
      %v743 = vunpack.c.l.b16 %v706
      %v744 = vunpack.c.l.b16 %v707
      %v745 = vunpack.c.l.b16 %v708
      %v746 = vpack.c.b16 %v731, %v730
      %v747 = vpack.c.b16 %v733, %v732
      %v748 = vpack.c.b16 %v735, %v734
      %v749 = vpack.c.b16 %v737, %v736
      %v750 = vpack.c.b16 %v739, %v738
      %v751 = vpack.c.b16 %v741, %v740
      %v752 = vpack.c.b16 %v743, %v742
      %v753 = vpack.c.b16 %v745, %v744
      %v762 = vmul.bf16 %v712, %v746
      %v763 = vmul.bf16 %v712, %v747
      %v764 = vmul.bf16 %v712, %v748
      %v765 = vmul.bf16 %v712, %v749
      %v766 = vmul.bf16 %v712, %v750
      %v767 = vmul.bf16 %v712, %v751
      %v768 = vmul.bf16 %v712, %v752
      %v769 = vmul.bf16 %v712, %v753
      %v770 = vunpack.c.h.b16 %v693
      %v771 = vunpack.c.h.b16 %v694
      %v772 = vunpack.c.h.b16 %v695
      %v773 = vunpack.c.h.b16 %v696
      %v774 = vunpack.c.h.b16 %v697
      %v775 = vunpack.c.h.b16 %v698
      %v776 = vunpack.c.h.b16 %v699
      %v777 = vunpack.c.h.b16 %v700
      %v778 = vunpack.c.h.b16 %v701
      %v779 = vunpack.c.h.b16 %v702
      %v780 = vunpack.c.h.b16 %v703
      %v781 = vunpack.c.h.b16 %v704
      %v782 = vunpack.c.h.b16 %v705
      %v783 = vunpack.c.h.b16 %v706
      %v784 = vunpack.c.h.b16 %v707
      %v785 = vunpack.c.h.b16 %v708
      %v786 = vpack.c.b16 %v771, %v770
      %v787 = vpack.c.b16 %v773, %v772
      %v788 = vpack.c.b16 %v775, %v774
      %v789 = vpack.c.b16 %v777, %v776
      %v790 = vpack.c.b16 %v779, %v778
      %v791 = vpack.c.b16 %v781, %v780
      %v792 = vpack.c.b16 %v783, %v782
      %v793 = vpack.c.b16 %v785, %v784
      %v802 = vmul.bf16 %v713, %v746
      %v803 = vmul.bf16 %v713, %v747
      %v804 = vmul.bf16 %v713, %v748
      %v805 = vmul.bf16 %v713, %v749
      %v806 = vmul.bf16 %v713, %v750
      %v807 = vmul.bf16 %v713, %v751
      %v808 = vmul.bf16 %v713, %v752
      %v809 = vmul.bf16 %v713, %v753
      %810 = vmatprep.subr.bf16.mxu0 0
      %811 = vmatpush1.bf16.xpose.msra.mxu0 %v769
      %812 = vmatprep.subr.bf16.mxu0 0
      %813 = vmatpush1.bf16.xpose.msra.mxu0 %v768
      %814 = vmatprep.subr.bf16.mxu0 0
      %815 = vmatpush1.bf16.xpose.msra.mxu0 %v767
      %816 = vmatprep.subr.bf16.mxu0 0
      %817 = vmatpush1.bf16.xpose.msra.mxu0 %v766
      %818 = vmatprep.subr.bf16.mxu0 0
      %819 = vmatpush1.bf16.xpose.msra.mxu0 %v765
      %820 = vmatprep.subr.bf16.mxu0 0
      %821 = vmatpush1.bf16.xpose.msra.mxu0 %v764
      %822 = vmatprep.subr.bf16.mxu0 0
      %823 = vmatpush1.bf16.xpose.msra.mxu0 %v763
      %824 = vmatprep.subr.bf16.mxu0 0
      %825 = vmatpush1.bf16.xpose.msra.mxu0 %v762
      %826 = vmatprep.subr.bf16.mxu0 0
      %827 = vmatpush2.bf16.xpose.msra.mxu0 0
      %828 = vmatprep.subr.bf16.mxu0 0
      %829 = vmatpush2.bf16.xpose.msra.mxu0 0
      %830 = vmatprep.subr.bf16.mxu0 0
      %831 = vmatpush2.bf16.xpose.msra.mxu0 0
      %832 = vmatprep.subr.bf16.mxu0 0
      %833 = vmatpush2.bf16.xpose.msra.mxu0 0
      %834 = vmatprep.subr.bf16.mxu0 0
      %835 = vmatpush2.bf16.xpose.msra.mxu0 0
      %836 = vmatprep.subr.bf16.mxu0 0
      %837 = vmatpush2.bf16.xpose.msra.mxu0 0
      %838 = vmatprep.subr.bf16.mxu0 0
      %839 = vmatpush2.bf16.xpose.msra.mxu0 0
      %840 = vmatprep.subr.bf16.mxu0 0
      %841 = vmatpush2.bf16.xpose.msra.mxu0 0
      %842 = vmatprep.mubr.bf16.mxu0 0
      %843 = vmatmul.mubr.bf16.gmra.mxu0 %v711
      %v844 = vpop.f32.mrf.mxu0
      %v845 = vadd.f32 0.0, %v844
      %v846 = vpop.f32.mrf.mxu0
      %v847 = vpop.f32.mrf.mxu0
      %v848 = vadd.f32 0.0, %v847
      %v849 = vpop.f32.mrf.mxu0
      %850 = vdwg.mxu0
      %v851 = vld [vmem:[%s417] sm:$0x1]
      %v853 = vlaneseq
      %v854 = vshrl.u32 %v853, 7
      %v855 = vsub.s32 0, %v854
      %v856 = vrot.slane %v851, %v855
      %v858 = vmul.f32 %v709, %v856
      %v859 = vmul.f32 %v710, %v856
      %vm860 = vcmp.gt.f32.partialorder %v858, 0.5
      %vm861 = vcmp.gt.f32.partialorder %v859, 0.5
      %v862 = vsel %vm860, %v845, -1e+09
      %v863 = vsel %vm861, %v848, -1e+09
      %vm864 = vcmask 130048
      %v865 = vsel %vm864, %v862, -inf
      %866 = vmax.xlane.f32.xlu0 %v865
      %v867 = vpop.xlane.xlu0 %866
      %v868 = vsel %vm864, %v863, -inf
      %869 = vmax.xlane.f32.xlu0 %v868
      %v870 = vpop.xlane.xlu0 %869
      %vm871 = vcmask 261248
      %v872 = vsel %vm871, %v862, -inf
      %873 = vmax.xlane.f32.xlu0 %v872
      %v874 = vpop.xlane.xlu0 %873
      %v875 = vsel %vm871, %v863, -inf
      %876 = vmax.xlane.f32.xlu0 %v875
      %v877 = vpop.xlane.xlu0 %876
      %vm878 = vcmask 392448
      %v879 = vsel %vm878, %v862, -inf
      %880 = vmax.xlane.f32.xlu0 %v879
      %v881 = vpop.xlane.xlu0 %880
      %v882 = vsel %vm878, %v863, -inf
      %883 = vmax.xlane.f32.xlu0 %v882
      %v884 = vpop.xlane.xlu0 %883
      %vm885 = vcmask 523648
      %v886 = vsel %vm885, %v862, -inf
      %887 = vmax.xlane.f32.xlu0 %v886
      %v888 = vpop.xlane.xlu0 %887
      %v889 = vsel %vm885, %v863, -inf
      %890 = vmax.xlane.f32.xlu0 %v889
      %v891 = vpop.xlane.xlu0 %890
      %vm892 = vcmask 654848
      %v893 = vsel %vm892, %v862, -inf
      %894 = vmax.xlane.f32.xlu0 %v893
      %v895 = vpop.xlane.xlu0 %894
      %v896 = vsel %vm892, %v863, -inf
      %897 = vmax.xlane.f32.xlu0 %v896
      %v898 = vpop.xlane.xlu0 %897
      %vm899 = vcmask 786048
      %v900 = vsel %vm899, %v862, -inf
      %901 = vmax.xlane.f32.xlu0 %v900
      %v902 = vpop.xlane.xlu0 %901
      %v903 = vsel %vm899, %v863, -inf
      %904 = vmax.xlane.f32.xlu0 %v903
      %v905 = vpop.xlane.xlu0 %904
      %vm906 = vcmask 917248
      %v907 = vsel %vm906, %v862, -inf
      %908 = vmax.xlane.f32.xlu0 %v907
      %v909 = vpop.xlane.xlu0 %908
      %v910 = vsel %vm906, %v863, -inf
      %911 = vmax.xlane.f32.xlu0 %v910
      %v912 = vpop.xlane.xlu0 %911
      %vm913 = vcmask 1048448
      %v914 = vsel %vm913, %v862, -inf
      %915 = vmax.xlane.f32.xlu0 %v914
      %v916 = vpop.xlane.xlu0 %915
      %v917 = vsel %vm913, %v863, -inf
      %918 = vmax.xlane.f32.xlu0 %v917
      %v919 = vpop.xlane.xlu0 %918
      %v920 = vsel %vm864, %v867, %v874
      %v921 = vsel %vm864, %v870, %v877
      %vm922 = vcmask 261120
      %v923 = vsel %vm922, %v920, %v881
      %v924 = vsel %vm922, %v921, %v884
      %vm925 = vcmask 392192
      %v926 = vsel %vm925, %v923, %v888
      %v927 = vsel %vm925, %v924, %v891
      %vm928 = vcmask 523264
      %v929 = vsel %vm928, %v926, %v895
      %v930 = vsel %vm928, %v927, %v898
      %vm931 = vcmask 654336
      %v932 = vsel %vm931, %v929, %v902
      %v933 = vsel %vm931, %v930, %v905
      %vm934 = vcmask 785408
      %v935 = vsel %vm934, %v932, %v909
      %v936 = vsel %vm934, %v933, %v912
      %vm937 = vcmask 916480
      %v938 = vsel %vm937, %v935, %v916
      %v939 = vsel %vm937, %v936, %v919
      %v940 = vsub.f32 %v862, %v938
      %v941 = vsub.f32 %v863, %v939
      %v942 = vmul.f32 %v940, 1.442695
      %v943 = vpow.pop %v942
      %v944 = vmul.f32 %v941, 1.442695
      %v945 = vpow.pop %v944
      %v946 = vpack.c.bf16 %v945, %v943
      %947 = vmatprep.subr.bf16.mxu0 %v793
      %948 = vmatpush1.bf16.msra.mxu0 %v809
      %949 = vmatprep.subr.bf16.mxu0 %v792
      %950 = vmatpush1.bf16.msra.mxu0 %v808
      %951 = vmatprep.subr.bf16.mxu0 %v791
      %952 = vmatpush1.bf16.msra.mxu0 %v807
      %953 = vmatprep.subr.bf16.mxu0 %v790
      %954 = vmatpush1.bf16.msra.mxu0 %v806
      %955 = vmatprep.subr.bf16.mxu0 %v789
      %956 = vmatpush1.bf16.msra.mxu0 %v805
      %957 = vmatprep.subr.bf16.mxu0 %v788
      %958 = vmatpush1.bf16.msra.mxu0 %v804
      %959 = vmatprep.subr.bf16.mxu0 %v787
      %960 = vmatpush1.bf16.msra.mxu0 %v803
      %961 = vmatprep.subr.bf16.mxu0 %v786
      %962 = vmatpush1.bf16.msra.mxu0 %v802
      %963 = vmatprep.subr.bf16.mxu0 0
      %964 = vmatpush2.bf16.msra.mxu0 0
      %965 = vmatprep.subr.bf16.mxu0 0
      %966 = vmatpush2.bf16.msra.mxu0 0
      %967 = vmatprep.subr.bf16.mxu0 0
      %968 = vmatpush2.bf16.msra.mxu0 0
      %969 = vmatprep.subr.bf16.mxu0 0
      %970 = vmatpush2.bf16.msra.mxu0 0
      %971 = vmatprep.subr.bf16.mxu0 0
      %972 = vmatpush2.bf16.msra.mxu0 0
      %973 = vmatprep.subr.bf16.mxu0 0
      %974 = vmatpush2.bf16.msra.mxu0 0
      %975 = vmatprep.subr.bf16.mxu0 0
      %976 = vmatpush2.bf16.msra.mxu0 0
      %977 = vmatprep.subr.bf16.mxu0 0
      %978 = vmatpush2.bf16.msra.mxu0 0
      %979 = vmatprep.mubr.bf16.mxu0 0
      %980 = vmatmul.mubr.bf16.gmra.mxu0 %v946
      %v981 = vpop.f32.mrf.mxu0
      %v982 = vadd.f32 0.0, %v981
      %v983 = vpop.f32.mrf.mxu0
      %v984 = vadd.f32 0.0, %v983
      %v985 = vpop.f32.mrf.mxu0
      %v986 = vadd.f32 0.0, %v985
      %v987 = vpop.f32.mrf.mxu0
      %v988 = vadd.f32 0.0, %v987
      %989 = vdwg.mxu0
      %v990 = vrcp.pop %v984
      %v991 = vrcp.pop %v988
      %v992 = vmul.f32 %v982, %v990
      %v993 = vmul.f32 %v986, %v991
      %v994 = vpack.c.bf16 %v993, %v992
      %v995 = vld [vmem:[%s6] sm:$0xf]
      %v996 = vld [vmem:[%s6 + $0x4] sm:$0xf]
      %v997 = vld [vmem:[%s6 + $0x8] sm:$0xf]
      %v998 = vld [vmem:[%s6 + $0xc] sm:$0xf]
      %v999 = vld [vmem:[%s6 + $0x10] sm:$0xf]
      %v1000 = vld [vmem:[%s6 + $0x14] sm:$0xf]
      %v1001 = vld [vmem:[%s6 + $0x18] sm:$0xf]
      %v1002 = vld [vmem:[%s6 + $0x1c] sm:$0xf]
      %v1003 = vld [vmem:[%s6 + $0x20] sm:$0xf]
      %v1004 = vld [vmem:[%s6 + $0x24] sm:$0xf]
      %v1005 = vld [vmem:[%s6 + $0x28] sm:$0xf]
      %v1006 = vld [vmem:[%s6 + $0x2c] sm:$0xf]
      %v1007 = vld [vmem:[%s6 + $0x30] sm:$0xf]
      %v1008 = vld [vmem:[%s6 + $0x34] sm:$0xf]
      %v1009 = vld [vmem:[%s6 + $0x38] sm:$0xf]
      %v1010 = vld [vmem:[%s6 + $0x3c] sm:$0xf]
      %v1011 = vld [vmem:[%s7] sm:$0x1]
      %v1013 = vlaneseq
      %v1014 = vshrl.u32 %v1013, 7
      %v1015 = vsub.s32 0, %v1014
      %v1016 = vrot.slane %v1011, %v1015
      %v1034 = vunpack.c.l.b16 %v995
      %v1035 = vunpack.c.l.b16 %v996
      %v1036 = vunpack.c.l.b16 %v997
      %v1037 = vunpack.c.l.b16 %v998
      %v1038 = vunpack.c.l.b16 %v999
      %v1039 = vunpack.c.l.b16 %v1000
      %v1040 = vunpack.c.l.b16 %v1001
      %v1041 = vunpack.c.l.b16 %v1002
      %v1042 = vunpack.c.l.b16 %v1003
      %v1043 = vunpack.c.l.b16 %v1004
      %v1044 = vunpack.c.l.b16 %v1005
      %v1045 = vunpack.c.l.b16 %v1006
      %v1046 = vunpack.c.l.b16 %v1007
      %v1047 = vunpack.c.l.b16 %v1008
      %v1048 = vunpack.c.l.b16 %v1009
      %v1049 = vunpack.c.l.b16 %v1010
      %v1050 = vpack.c.b16 %v1035, %v1034
      %v1051 = vpack.c.b16 %v1037, %v1036
      %v1052 = vpack.c.b16 %v1039, %v1038
      %v1053 = vpack.c.b16 %v1041, %v1040
      %v1054 = vpack.c.b16 %v1043, %v1042
      %v1055 = vpack.c.b16 %v1045, %v1044
      %v1056 = vpack.c.b16 %v1047, %v1046
      %v1057 = vpack.c.b16 %v1049, %v1048
      %1066 = vmatprep.subr.bf16.mxu0 0
      %1067 = vmatpush1.bf16.msra.mxu0 %v1057
      %1068 = vmatprep.subr.bf16.mxu0 0
      %1069 = vmatpush1.bf16.msra.mxu0 %v1056
      %1070 = vmatprep.subr.bf16.mxu0 0
      %1071 = vmatpush1.bf16.msra.mxu0 %v1055
      %1072 = vmatprep.subr.bf16.mxu0 0
      %1073 = vmatpush1.bf16.msra.mxu0 %v1054
      %1074 = vmatprep.subr.bf16.mxu0 0
      %1075 = vmatpush1.bf16.msra.mxu0 %v1053
      %1076 = vmatprep.subr.bf16.mxu0 0
      %1077 = vmatpush1.bf16.msra.mxu0 %v1052
      %1078 = vmatprep.subr.bf16.mxu0 0
      %1079 = vmatpush1.bf16.msra.mxu0 %v1051
      %1080 = vmatprep.subr.bf16.mxu0 0
      %1081 = vmatpush1.bf16.msra.mxu0 %v1050
      %1082 = vmatprep.subr.bf16.mxu0 0
      %1083 = vmatpush2.bf16.msra.mxu0 0
      %1084 = vmatprep.subr.bf16.mxu0 0
      %1085 = vmatpush2.bf16.msra.mxu0 0
      %1086 = vmatprep.subr.bf16.mxu0 0
      %1087 = vmatpush2.bf16.msra.mxu0 0
      %1088 = vmatprep.subr.bf16.mxu0 0
      %1089 = vmatpush2.bf16.msra.mxu0 0
      %1090 = vmatprep.subr.bf16.mxu0 0
      %1091 = vmatpush2.bf16.msra.mxu0 0
      %1092 = vmatprep.subr.bf16.mxu0 0
      %1093 = vmatpush2.bf16.msra.mxu0 0
      %1094 = vmatprep.subr.bf16.mxu0 0
      %1095 = vmatpush2.bf16.msra.mxu0 0
      %1096 = vmatprep.subr.bf16.mxu0 0
      %1097 = vmatpush2.bf16.msra.mxu0 0
      %1098 = vmatprep.mubr.bf16.mxu0 0
      %1099 = vmatmul.mubr.bf16.gmra.mxu0 %v994
      %v1100 = vpop.f32.mrf.mxu0
      %v1101 = vadd.f32 %v1016, %v1100
      %v1102 = vpop.f32.mrf.mxu0
      %v1103 = vpop.f32.mrf.mxu0
      %v1104 = vadd.f32 %v1016, %v1103
      %v1105 = vpop.f32.mrf.mxu0
      %1106 = vdwg.mxu0
      %v1107 = vadd.f32 %v429, %v1101
      %v1108 = vadd.f32 %v430, %v1104
      %1109 = vadd.xlane.f32.xlu0 %v1107
      %v1110 = vpop.xlane.xlu0 %1109
      %1111 = vadd.xlane.f32.xlu0 %v1108
      %v1112 = vpop.xlane.xlu0 %1111
      %v1113 = vrcp.pop 128.0
      %v1114 = vmul.f32 %v1110, %v1113
      %v1115 = vmul.f32 %v1112, %v1113
      %v1116 = vmul.f32 %v1107, %v1107
      %v1117 = vmul.f32 %v1108, %v1108
      %1118 = vadd.xlane.f32.xlu0 %v1116
      %v1119 = vpop.xlane.xlu0 %1118
      %1120 = vadd.xlane.f32.xlu0 %v1117
      %v1121 = vpop.xlane.xlu0 %1120
      %v1122 = vmul.f32 %v1119, %v1113
      %v1123 = vmul.f32 %v1121, %v1113
      %v1124 = vmul.f32 %v1114, %v1114
      %v1125 = vmul.f32 %v1115, %v1115
      %v1126 = vsub.f32 %v1122, %v1124
      %v1127 = vsub.f32 %v1123, %v1125
      %v1128 = vmax.f32 %v1126, 0.0
      %v1129 = vmax.f32 %v1127, 0.0
      %v1130 = vsub.f32 %v1107, %v1114
      %v1131 = vsub.f32 %v1108, %v1115
      %v1132 = vadd.f32 %v1128, 1e-05
      %v1133 = vadd.f32 %v1129, 1e-05
      %v1134 = vrsqrt.pop %v1132
      %v1135 = vrsqrt.pop %v1133
      %v1136 = vmul.f32 %v1130, %v1134
      %v1137 = vmul.f32 %v1131, %v1135
      %v1138 = vld [vmem:[%s8] sm:$0x1]
      %v1140 = vlaneseq
      %v1141 = vshrl.u32 %v1140, 7
      %v1142 = vsub.s32 0, %v1141
      %v1143 = vrot.slane %v1138, %v1142
      %v1145 = vmul.f32 %v1136, %v1143
      %v1146 = vmul.f32 %v1137, %v1143
      %v1147 = vld [vmem:[%s9] sm:$0x1]
      %v1149 = vlaneseq
      %v1150 = vshrl.u32 %v1149, 7
      %v1151 = vsub.s32 0, %v1150
      %v1152 = vrot.slane %v1147, %v1151
      %v1154 = vadd.f32 %v1145, %v1152
      %v1155 = vadd.f32 %v1146, %v1152
      %v1156 = vpack.c.bf16 %v1155, %v1154
      %v1157 = vld [vmem:[%s10] sm:$0xf]
      %v1158 = vld [vmem:[%s10 + $0x4] sm:$0xf]
      %v1159 = vld [vmem:[%s10 + $0x8] sm:$0xf]
      %v1160 = vld [vmem:[%s10 + $0xc] sm:$0xf]
      %v1161 = vld [vmem:[%s10 + $0x10] sm:$0xf]
      %v1162 = vld [vmem:[%s10 + $0x14] sm:$0xf]
      %v1163 = vld [vmem:[%s10 + $0x18] sm:$0xf]
      %v1164 = vld [vmem:[%s10 + $0x1c] sm:$0xf]
      %v1165 = vld [vmem:[%s10 + $0x20] sm:$0xf]
      %v1166 = vld [vmem:[%s10 + $0x24] sm:$0xf]
      %v1167 = vld [vmem:[%s10 + $0x28] sm:$0xf]
      %v1168 = vld [vmem:[%s10 + $0x2c] sm:$0xf]
      %v1169 = vld [vmem:[%s10 + $0x30] sm:$0xf]
      %v1170 = vld [vmem:[%s10 + $0x34] sm:$0xf]
      %v1171 = vld [vmem:[%s10 + $0x38] sm:$0xf]
      %v1172 = vld [vmem:[%s10 + $0x3c] sm:$0xf]
      %v1173 = vld [vmem:[%s11] sm:$0x1]
      %v1175 = vlaneseq
      %v1176 = vshrl.u32 %v1175, 7
      %v1177 = vsub.s32 0, %v1176
      %v1178 = vrot.slane %v1173, %v1177
      %v1196 = vunpack.c.l.b16 %v1157
      %v1197 = vunpack.c.l.b16 %v1158
      %v1198 = vunpack.c.l.b16 %v1159
      %v1199 = vunpack.c.l.b16 %v1160
      %v1200 = vunpack.c.l.b16 %v1161
      %v1201 = vunpack.c.l.b16 %v1162
      %v1202 = vunpack.c.l.b16 %v1163
      %v1203 = vunpack.c.l.b16 %v1164
      %v1204 = vunpack.c.l.b16 %v1165
      %v1205 = vunpack.c.l.b16 %v1166
      %v1206 = vunpack.c.l.b16 %v1167
      %v1207 = vunpack.c.l.b16 %v1168
      %v1208 = vunpack.c.l.b16 %v1169
      %v1209 = vunpack.c.l.b16 %v1170
      %v1210 = vunpack.c.l.b16 %v1171
      %v1211 = vunpack.c.l.b16 %v1172
      %v1212 = vpack.c.b16 %v1197, %v1196
      %v1213 = vpack.c.b16 %v1199, %v1198
      %v1214 = vpack.c.b16 %v1201, %v1200
      %v1215 = vpack.c.b16 %v1203, %v1202
      %v1216 = vpack.c.b16 %v1205, %v1204
      %v1217 = vpack.c.b16 %v1207, %v1206
      %v1218 = vpack.c.b16 %v1209, %v1208
      %v1219 = vpack.c.b16 %v1211, %v1210
      %1228 = vmatprep.subr.bf16.mxu0 0
      %1229 = vmatpush1.bf16.msra.mxu0 %v1219
      %1230 = vmatprep.subr.bf16.mxu0 0
      %1231 = vmatpush1.bf16.msra.mxu0 %v1218
      %1232 = vmatprep.subr.bf16.mxu0 0
      %1233 = vmatpush1.bf16.msra.mxu0 %v1217
      %1234 = vmatprep.subr.bf16.mxu0 0
      %1235 = vmatpush1.bf16.msra.mxu0 %v1216
      %1236 = vmatprep.subr.bf16.mxu0 0
      %1237 = vmatpush1.bf16.msra.mxu0 %v1215
      %1238 = vmatprep.subr.bf16.mxu0 0
      %1239 = vmatpush1.bf16.msra.mxu0 %v1214
      %1240 = vmatprep.subr.bf16.mxu0 0
      %1241 = vmatpush1.bf16.msra.mxu0 %v1213
      %1242 = vmatprep.subr.bf16.mxu0 0
      %1243 = vmatpush1.bf16.msra.mxu0 %v1212
      %1244 = vmatprep.subr.bf16.mxu0 0
      %1245 = vmatpush2.bf16.msra.mxu0 0
      %1246 = vmatprep.subr.bf16.mxu0 0
      %1247 = vmatpush2.bf16.msra.mxu0 0
      %1248 = vmatprep.subr.bf16.mxu0 0
      %1249 = vmatpush2.bf16.msra.mxu0 0
      %1250 = vmatprep.subr.bf16.mxu0 0
      %1251 = vmatpush2.bf16.msra.mxu0 0
      %1252 = vmatprep.subr.bf16.mxu0 0
      %1253 = vmatpush2.bf16.msra.mxu0 0
      %1254 = vmatprep.subr.bf16.mxu0 0
      %1255 = vmatpush2.bf16.msra.mxu0 0
      %1256 = vmatprep.subr.bf16.mxu0 0
      %1257 = vmatpush2.bf16.msra.mxu0 0
      %1258 = vmatprep.subr.bf16.mxu0 0
      %1259 = vmatpush2.bf16.msra.mxu0 0
      %1260 = vmatprep.mubr.bf16.mxu0 0
      %1261 = vmatmul.mubr.bf16.gmra.mxu0 %v1156
      %v1262 = vpop.f32.mrf.mxu0
      %v1263 = vadd.f32 %v1178, %v1262
      %v1264 = vpop.f32.mrf.mxu0
      %v1265 = vpop.f32.mrf.mxu0
      %v1266 = vadd.f32 %v1178, %v1265
      %v1267 = vpop.f32.mrf.mxu0
      %1268 = vdwg.mxu0
      %1269 = vst [vmem:[%s427] sm:$0xff] %v1263
      %1270 = vst [vmem:[%s427 + $0x8] sm:$0xff] %v1266
      %p1271 = scmp.lt.s32.totalorder %s23, 1
      %s1272 = scalar_select %p1271, %s23, 1
      %s1273 = smul.addr %s1272, 2
      %s1274 = smul.addr %s1273, 8
      %s1275 = scalar_lea.vmem %s12, %s1274
      // Predicated region
      $region69: #{_forward_core.1} parent=67 // pred_check
        %p1276 = pneg %p303
      $region70: #{_forward_core.1} parent=67 // pred_check_branch
        %1278 = sbr.rel (%p1276) target = $region72
      $region71: #{_forward_core.1} parent=67 // pred_region
        _
      $region72: #{_forward_core.1} parent=67 // pred_fallthru
        _
    $region68: #{_forward_core.1} parent=5 // pred_fallthru
      _
    %p1279 = scmp.le.s32.totalorder 2, %s18
    // Predicated region
    $region73: #{_forward_core.1} parent=5 // pred_check
      %p1280 = pneg %p1279
    $region74: #{_forward_core.1} parent=5 // pred_check_branch
      %1282 = sbr.rel (%p1280) target = $region76
    $region75: #{_forward_core.1} parent=5 // pred_region
      %s1283 = ssub.s32 %s18, 2
      // Predicated region
      $region77: #{_forward_core.1} parent=75 // pred_check
        %p1284 = pneg %p309
      $region78: #{_forward_core.1} parent=75 // pred_check_branch
        %1286 = sbr.rel (%p1284) target = $region80
      $region79: #{_forward_core.1} parent=75 // pred_region
        %p1287 = scmp.lt.s32.totalorder %s24, 1
        %s1288 = scalar_select %p1287, %s24, 1
        %s1289 = smul.addr %s1288, 2
        %s1290 = smul.addr %s1289, 8
        %s1291 = scalar_lea.vmem %s12, %s1290
      $region80: #{_forward_core.1} parent=75 // pred_fallthru
        _
    $region76: #{_forward_core.1} parent=5 // pred_fallthru
      _
  $region6: #{_forward_core.1} parent=0 // loop_footer
    %s22 = sadd.s32 1, %s18
  $region7: #{_forward_core.1} parent=0 // loop_footer_branch
    %17 = sbr.rel target = $region3
  $region8: #{_forward_core.1} parent=0 // loop_exit
    _

</llo_original>
